<compile_context>
chip_gen: v7x
topology: tpu7x:2x2x1
jax: 0.10.0
libtpu: 0.0.40
codegen_flags: <defaults>
</compile_context>

<pallas_src>
import jax
import jax.numpy as jnp
import numpy as np
from jax.experimental import pallas as pl
from jax.experimental.pallas import tpu as pltpu


# ----------------------------- Pallas kernel ---------------------------------

def _shifted(h, mask_ref):
    """h: (R, C) flat (batch*time, channels). mask_ref: (R, 2) with col0 = 't-1 valid',
    col1 = 't+1 valid' within each batch element. Returns (prev, nxt) row-shifted
    copies with zero rows at batch-element boundaries."""
    R, C = h.shape
    z = jnp.zeros((1, C), jnp.float32)
    prev = jnp.concatenate([z, h[:R - 1]], axis=0) * mask_ref[:, 0:1]
    nxt = jnp.concatenate([h[1:], z], axis=0) * mask_ref[:, 1:2]
    return prev, nxt


def _conv3_bn_relu(h, mask_ref, w_ref, s_ref, b_ref):
    """k=3 / pad=1 conv as three per-tap matmuls + folded BN scale/bias + ReLU.
    h: (R, Cin), w_ref: (3, Cin, Cout) in tap order [t-1, t, t+1]."""
    prev, nxt = _shifted(h, mask_ref)
    y = jnp.dot(h, w_ref[1], preferred_element_type=jnp.float32)
    y = y + jnp.dot(prev, w_ref[0], preferred_element_type=jnp.float32)
    y = y + jnp.dot(nxt, w_ref[2], preferred_element_type=jnp.float32)
    return jnp.maximum(y * s_ref[...] + b_ref[...], 0.0)


def _maxpool2_rows(y, scratch_ref):
    """Row-pair max pool: y (R, C) -> (R//2, C) via stride-2 reads from a VMEM scratch."""
    R, _ = y.shape
    scratch_ref[...] = y
    return jnp.maximum(scratch_ref[pl.ds(0, R // 2, stride=2), :],
                       scratch_ref[pl.ds(1, R // 2, stride=2), :])


def cnn_kernel(x_ref, m1_ref, m2_ref,
               w1_ref, s1_ref, b1_ref,
               w2_ref, s2_ref, b2_ref,
               wfc1_ref, bfc1_ref, wfc2_ref, bfc2_ref,
               out_ref,
               y1_scr, y2_scr, p2_scr):
    TB = out_ref.shape[0]                               # batch tile size
    pooled = wfc1_ref.shape[0]                          # window_size // 4

    # conv1 + BN + ReLU, then MaxPool1d(2).
    y1 = _conv3_bn_relu(x_ref[...], m1_ref, w1_ref, s1_ref, b1_ref)   # (TB*L, 64)
    h1 = _maxpool2_rows(y1, y1_scr)                                   # (TB*L/2, 64)

    # conv2 + BN + ReLU, then MaxPool1d(2).
    y2 = _conv3_bn_relu(h1, m2_ref, w2_ref, s2_ref, b2_ref)           # (TB*L/2, 128)
    p2_scr[...] = _maxpool2_rows(y2, y2_scr)                          # (TB*pooled, 128)

    # fc1 + ReLU: contract over (t, c). p2 rows are (b, t)-ordered, so gather the
    # per-t batch rows with a stride=pooled read -> each matmul has TB rows.
    acc = jnp.dot(p2_scr[pl.ds(0, TB, stride=pooled), :], wfc1_ref[0],
                  preferred_element_type=jnp.float32)
    for t in range(1, pooled):                          # static, small (window_size // 4)
        acc = acc + jnp.dot(p2_scr[pl.ds(t, TB, stride=pooled), :], wfc1_ref[t],
                            preferred_element_type=jnp.float32)
    h = jnp.maximum(acc + bfc1_ref[...], 0.0)           # (TB, 256)

    # fc2, output padded to 128 lanes (wrapper slices back to num_classes).
    out_ref[...] = (jnp.dot(h, wfc2_ref[...], preferred_element_type=jnp.float32)
                    + bfc2_ref[...])


# ------------------------------- wrapper --------------------------------------

def cnn_forward_pallas(x, params, num_classes):
    B, L, Cin = x.shape
    if L % 4 != 0:
        raise ValueError("window_size must be divisible by 4 (two MaxPool1d(2) layers)")
    if num_classes > 128:
        raise ValueError("num_classes > 128 not supported by the padded fc2 output")
    pooled = L // 4
    L2 = L // 2
    eps = 1e-5

    # Fold BatchNorm (running stats) + conv bias into per-channel scale/bias.
    s1 = params["g1"] / jnp.sqrt(params["v1"] + eps)
    b1 = params["be1"] + (params["b1"] - params["m1"]) * s1
    s2 = params["g2"] / jnp.sqrt(params["v2"] + eps)
    b2 = params["be2"] + (params["b2"] - params["m2"]) * s2
    s1r, b1r = s1.reshape(1, 64), b1.reshape(1, 64)
    s2r, b2r = s2.reshape(1, 128), b2.reshape(1, 128)

    # Per-tap conv weights: (Cout, Cin, 3) -> (3, Cin, Cout), tap order [t-1, t, t+1].
    w1s = jnp.transpose(params["w1"], (2, 1, 0))        # (3, Cin, 64)
    w2s = jnp.transpose(params["w2"], (2, 1, 0))        # (3, 64, 128)

    # fc1 weight (256, 128*pooled), PyTorch channel-major flatten -> (pooled, 128, 256).
    wfc1r = jnp.transpose(params["wfc1"].reshape(256, 128, pooled), (2, 1, 0))
    bfc1 = params["bfc1"].reshape(1, 256)

    # fc2 padded to 128 output lanes (lane-dense stores).
    wfc2p = jnp.zeros((256, 128), jnp.float32).at[:, :num_classes].set(params["wfc2"].T)
    bfc2p = jnp.zeros((1, 128), jnp.float32).at[0, :num_classes].set(params["bfc2"])

    # Batch tiling: TB elements per grid step (128 fills MXU sublanes); pad B up.
    TB = B if B <= 128 else 128
    B_pad = ((B + TB - 1) // TB) * TB
    xp = x.astype(jnp.float32)
    if B_pad != B:
        xp = jnp.concatenate([xp, jnp.zeros((B_pad - B, L, Cin), jnp.float32)], axis=0)
    xf = xp.reshape(B_pad * L, Cin)                     # flat time-major rows

    # Batch-boundary validity masks for the shifted conv taps ({0,1}).
    r1 = np.arange(TB * L)
    m1 = jnp.asarray(np.stack([(r1 % L) != 0, (r1 % L) != (L - 1)], axis=1), jnp.float32)
    r2 = np.arange(TB * L2)
    m2 = jnp.asarray(np.stack([(r2 % L2) != 0, (r2 % L2) != (L2 - 1)], axis=1), jnp.float32)

    def resident(arr):                                  # whole array, same block each step
        n = arr.ndim
        return pl.BlockSpec(arr.shape, lambda i, n=n: (0,) * n)

    out = pl.pallas_call(
        cnn_kernel,
        out_shape=jax.ShapeDtypeStruct((B_pad, 128), jnp.float32),
        grid=(B_pad // TB,),
        in_specs=[
            pl.BlockSpec((TB * L, Cin), lambda i: (i, 0)),
            resident(m1), resident(m2),
            resident(w1s), resident(s1r), resident(b1r),
            resident(w2s), resident(s2r), resident(b2r),
            resident(wfc1r), resident(bfc1),
            resident(wfc2p), resident(bfc2p),
        ],
        out_specs=pl.BlockSpec((TB, 128), lambda i: (i, 0)),
        scratch_shapes=[
            pltpu.VMEM((TB * L, 64), jnp.float32),        # conv1 output (for pool1)
            pltpu.VMEM((TB * L2, 128), jnp.float32),      # conv2 output (for pool2)
            pltpu.VMEM((TB * pooled, 128), jnp.float32),  # pooled features (for fc1 gather)
        ],
        compiler_params=pltpu.CompilerParams(
            dimension_semantics=("parallel",)),           # independent batch tiles (v7x: 2 TCs)
    )(xf, m1, m2, w1s, s1r, b1r, w2s, s2r, b2r, wfc1r, bfc1, wfc2p, bfc2p)

    logits = out[:B, :num_classes]
    return logits[:, 0] if num_classes == 1 else logits  # matches .squeeze(1)


# --------------------------- pure-JAX reference --------------------------------

def cnn_forward_reference(x, params, num_classes):
    """Mirrors the PyTorch forward (NCW layout, inference-mode BN/dropout)."""
    eps = 1e-5
    xc = jnp.transpose(x, (0, 2, 1))                    # (B, Cin, L)

    def conv1d(h, W, b):                                # W: (O, C, 3)
        L = h.shape[-1]
        hp = jnp.pad(h, ((0, 0), (0, 0), (1, 1)))
        out = jnp.zeros((h.shape[0], W.shape[0], L), jnp.float32)
        for k in range(3):
            out = out + jnp.einsum("bcl,oc->bol", hp[:, :, k:k + L], W[:, :, k])
        return out + b[None, :, None]

    def bn(h, g, be, m, v):
        return (h - m[None, :, None]) / jnp.sqrt(v[None, :, None] + eps) * \
               g[None, :, None] + be[None, :, None]

    def mp(h):
        B, C, L = h.shape
        return jnp.max(h.reshape(B, C, L // 2, 2), axis=-1)

    h = jax.nn.relu(bn(conv1d(xc, params["w1"], params["b1"]),
                       params["g1"], params["be1"], params["m1"], params["v1"]))
    h = mp(h)
    h = jax.nn.relu(bn(conv1d(h, params["w2"], params["b2"]),
                       params["g2"], params["be2"], params["m2"], params["v2"]))
    h = mp(h)
    h = h.reshape(h.shape[0], -1)                       # channel-major flatten
    h = jax.nn.relu(h @ params["wfc1"].T + params["bfc1"])
    out = h @ params["wfc2"].T + params["bfc2"]
    return out[:, 0] if num_classes == 1 else out


# --------------------------------- main ----------------------------------------

def make_params(key, input_dim, window_size, num_classes):
    pooled = window_size // 4
    ks = jax.random.split(key, 20)

    def uni(k, shape, fan_in):
        bound = 1.0 / np.sqrt(fan_in)
        return jax.random.uniform(k, shape, jnp.float32, -bound, bound)

    return dict(
        w1=uni(ks[0], (64, input_dim, 3), input_dim * 3),
        b1=uni(ks[1], (64,), input_dim * 3),
        g1=1.0 + 0.1 * jax.random.normal(ks[2], (64,), jnp.float32),
        be1=0.1 * jax.random.normal(ks[3], (64,), jnp.float32),
        m1=0.1 * jax.random.normal(ks[4], (64,), jnp.float32),
        v1=0.5 + jax.random.uniform(ks[5], (64,), jnp.float32),
        w2=uni(ks[6], (128, 64, 3), 64 * 3),
        b2=uni(ks[7], (128,), 64 * 3),
        g2=1.0 + 0.1 * jax.random.normal(ks[8], (128,), jnp.float32),
        be2=0.1 * jax.random.normal(ks[9], (128,), jnp.float32),
        m2=0.1 * jax.random.normal(ks[10], (128,), jnp.float32),
        v2=0.5 + jax.random.uniform(ks[11], (128,), jnp.float32),
        wfc1=uni(ks[12], (256, 128 * pooled), 128 * pooled),
        bfc1=uni(ks[13], (256,), 128 * pooled),
        wfc2=uni(ks[14], (num_classes, 256), 256),
        bfc2=uni(ks[15], (num_classes,), 256),
    )


if __name__ == "__main__":
    B, window_size, input_dim, num_classes = 2, 16, 4, 1

    key = jax.random.PRNGKey(0)
    kx, kp = jax.random.split(key)
    x = jax.random.normal(kx, (B, window_size, input_dim), jnp.float32)
    params = make_params(kp, input_dim, window_size, num_classes)

    out = jax.block_until_ready(cnn_forward_pallas(x, params, num_classes))
    ref = jax.block_until_ready(cnn_forward_reference(x, params, num_classes))
    np.testing.assert_allclose(np.asarray(out), np.asarray(ref), rtol=2e-2, atol=2e-2)

    print("KERNEL_OK")
</pallas_src>

<mosaic_0001>
module attributes {stable_mosaic.version = 11 : i64} {
  func.func @cnn_kernel(%arg0: i32, %arg1: memref<32x4xf32, #tpu.memory_space<vmem>>, %arg2: memref<32x2xf32, #tpu.memory_space<vmem>>, %arg3: memref<16x2xf32, #tpu.memory_space<vmem>>, %arg4: memref<3x4x64xf32, #tpu.memory_space<vmem>>, %arg5: memref<1x64xf32, #tpu.memory_space<vmem>>, %arg6: memref<1x64xf32, #tpu.memory_space<vmem>>, %arg7: memref<3x64x128xf32, #tpu.memory_space<vmem>>, %arg8: memref<1x128xf32, #tpu.memory_space<vmem>>, %arg9: memref<1x128xf32, #tpu.memory_space<vmem>>, %arg10: memref<4x128x256xf32, #tpu.memory_space<vmem>>, %arg11: memref<1x256xf32, #tpu.memory_space<vmem>>, %arg12: memref<256x128xf32, #tpu.memory_space<vmem>>, %arg13: memref<1x128xf32, #tpu.memory_space<vmem>>, %arg14: memref<2x128xf32, #tpu.memory_space<vmem>>, %arg15: memref<32x64xf32, #tpu.memory_space<vmem>>, %arg16: memref<16x128xf32, #tpu.memory_space<vmem>>, %arg17: memref<8x128xf32, #tpu.memory_space<vmem>>) attributes {dimension_semantics = [#tpu.dimension_semantics<parallel>], iteration_bounds = array<i64: 1>, scalar_prefetch = 0 : i64, scratch_operands = 3 : i64, tpu.core_type = #tpu.core_type<tc>, window_params = [{transform_indices = @transform_0, window_bounds = array<i64: 32, 4>}, {pipeline_mode = #tpu.pipeline_mode<synchronous>, transform_indices = @transform_1, window_bounds = array<i64: 32, 2>}, {pipeline_mode = #tpu.pipeline_mode<synchronous>, transform_indices = @transform_2, window_bounds = array<i64: 16, 2>}, {pipeline_mode = #tpu.pipeline_mode<synchronous>, transform_indices = @transform_3, window_bounds = array<i64: 3, 4, 64>}, {pipeline_mode = #tpu.pipeline_mode<synchronous>, transform_indices = @transform_4, window_bounds = array<i64: 1, 64>}, {pipeline_mode = #tpu.pipeline_mode<synchronous>, transform_indices = @transform_5, window_bounds = array<i64: 1, 64>}, {pipeline_mode = #tpu.pipeline_mode<synchronous>, transform_indices = @transform_6, window_bounds = array<i64: 3, 64, 128>}, {pipeline_mode = #tpu.pipeline_mode<synchronous>, transform_indices = @transform_7, window_bounds = array<i64: 1, 128>}, {pipeline_mode = #tpu.pipeline_mode<synchronous>, transform_indices = @transform_8, window_bounds = array<i64: 1, 128>}, {pipeline_mode = #tpu.pipeline_mode<synchronous>, transform_indices = @transform_9, window_bounds = array<i64: 4, 128, 256>}, {pipeline_mode = #tpu.pipeline_mode<synchronous>, transform_indices = @transform_10, window_bounds = array<i64: 1, 256>}, {pipeline_mode = #tpu.pipeline_mode<synchronous>, transform_indices = @transform_11, window_bounds = array<i64: 256, 128>}, {pipeline_mode = #tpu.pipeline_mode<synchronous>, transform_indices = @transform_12, window_bounds = array<i64: 1, 128>}, {transform_indices = @transform_13, window_bounds = array<i64: 2, 128>}]} {
    %c0 = arith.constant 0 : index
    %c0_0 = arith.constant 0 : index
    %0 = vector.load %arg1[%c0, %c0_0] : memref<32x4xf32, #tpu.memory_space<vmem>>, vector<32x4xf32>
    %cst = arith.constant 0.000000e+00 : f32
    %1 = vector.broadcast %cst : f32 to vector<1x4xf32>
    %2 = vector.extract_strided_slice %0 {offsets = [0, 0], sizes = [31, 4], strides = [1, 1]} : vector<32x4xf32> to vector<31x4xf32>
    %3 = tpu.concatenate %1, %2 in 0 : vector<1x4xf32>, vector<31x4xf32> -> vector<32x4xf32>
    %c0_1 = arith.constant 0 : index
    %c0_2 = arith.constant 0 : index
    %4 = vector.load %arg2[%c0_1, %c0_2] : memref<32x2xf32, #tpu.memory_space<vmem>>, vector<32x1xf32>
    %5 = vector.broadcast %4 : vector<32x1xf32> to vector<32x4xf32>
    %6 = arith.mulf %3, %5 : vector<32x4xf32>
    %7 = vector.extract_strided_slice %0 {offsets = [1, 0], sizes = [31, 4], strides = [1, 1]} : vector<32x4xf32> to vector<31x4xf32>
    %8 = tpu.concatenate %7, %1 in 0 : vector<31x4xf32>, vector<1x4xf32> -> vector<32x4xf32>
    %c0_3 = arith.constant 0 : index
    %c1 = arith.constant 1 : index
    %9 = vector.load %arg2[%c0_3, %c1] : memref<32x2xf32, #tpu.memory_space<vmem>>, vector<32x1xf32>
    %10 = vector.broadcast %9 : vector<32x1xf32> to vector<32x4xf32>
    %11 = arith.mulf %8, %10 : vector<32x4xf32>
    %c1_4 = arith.constant 1 : index
    %c0_5 = arith.constant 0 : index
    %c0_6 = arith.constant 0 : index
    %12 = vector.load %arg4[%c1_4, %c0_5, %c0_6] : memref<3x4x64xf32, #tpu.memory_space<vmem>>, vector<1x4x64xf32>
    %13 = vector.shape_cast %12 : vector<1x4x64xf32> to vector<4x64xf32>
    %cst_7 = arith.constant dense<0.000000e+00> : vector<32x64xf32>
    %14 = tpu.matmul %0, %13, %cst_7 {dimension_numbers = #tpu.dot_dimension_numbers<[1], [0], [0], [1], [0, 0, 1, 1], [], []>} : vector<32x4xf32>, vector<4x64xf32>, vector<32x64xf32> -> vector<32x64xf32>
    %c0_8 = arith.constant 0 : index
    %c0_9 = arith.constant 0 : index
    %c0_10 = arith.constant 0 : index
    %15 = vector.load %arg4[%c0_8, %c0_9, %c0_10] : memref<3x4x64xf32, #tpu.memory_space<vmem>>, vector<1x4x64xf32>
    %16 = vector.shape_cast %15 : vector<1x4x64xf32> to vector<4x64xf32>
    %cst_11 = arith.constant dense<0.000000e+00> : vector<32x64xf32>
    %17 = tpu.matmul %6, %16, %cst_11 {dimension_numbers = #tpu.dot_dimension_numbers<[1], [0], [0], [1], [0, 0, 1, 1], [], []>} : vector<32x4xf32>, vector<4x64xf32>, vector<32x64xf32> -> vector<32x64xf32>
    %18 = arith.addf %14, %17 : vector<32x64xf32>
    %c2 = arith.constant 2 : index
    %c0_12 = arith.constant 0 : index
    %c0_13 = arith.constant 0 : index
    %19 = vector.load %arg4[%c2, %c0_12, %c0_13] : memref<3x4x64xf32, #tpu.memory_space<vmem>>, vector<1x4x64xf32>
    %20 = vector.shape_cast %19 : vector<1x4x64xf32> to vector<4x64xf32>
    %cst_14 = arith.constant dense<0.000000e+00> : vector<32x64xf32>
    %21 = tpu.matmul %11, %20, %cst_14 {dimension_numbers = #tpu.dot_dimension_numbers<[1], [0], [0], [1], [0, 0, 1, 1], [], []>} : vector<32x4xf32>, vector<4x64xf32>, vector<32x64xf32> -> vector<32x64xf32>
    %22 = arith.addf %18, %21 : vector<32x64xf32>
    %c0_15 = arith.constant 0 : index
    %c0_16 = arith.constant 0 : index
    %23 = vector.load %arg5[%c0_15, %c0_16] : memref<1x64xf32, #tpu.memory_space<vmem>>, vector<1x64xf32>
    %24 = vector.broadcast %23 : vector<1x64xf32> to vector<32x64xf32>
    %25 = arith.mulf %22, %24 : vector<32x64xf32>
    %c0_17 = arith.constant 0 : index
    %c0_18 = arith.constant 0 : index
    %26 = vector.load %arg6[%c0_17, %c0_18] : memref<1x64xf32, #tpu.memory_space<vmem>>, vector<1x64xf32>
    %27 = vector.broadcast %26 : vector<1x64xf32> to vector<32x64xf32>
    %28 = arith.addf %25, %27 : vector<32x64xf32>
    %cst_19 = arith.constant 0.000000e+00 : f32
    %29 = vector.broadcast %cst_19 : f32 to vector<32x64xf32>
    %30 = arith.maximumf %28, %29 : vector<32x64xf32>
    %c0_20 = arith.constant 0 : index
    %c0_21 = arith.constant 0 : index
    %31 = vector.load %arg15[%c0_20, %c0_21] : memref<32x64xf32, #tpu.memory_space<vmem>>, vector<32x64xf32>
    tpu.vector_store %arg15[%c0_20, %c0_21], %30 {strides = array<i32>} : memref<32x64xf32, #tpu.memory_space<vmem>>, vector<32x64xf32>,
    %c0_22 = arith.constant 0 : index
    %c0_23 = arith.constant 0 : index
    %32 = tpu.strided_load %arg15[%c0_22, %c0_23] {strides = array<i32: 2, 1>} : memref<32x64xf32, #tpu.memory_space<vmem>>, vector<16x64xf32>
    %c1_24 = arith.constant 1 : index
    %c0_25 = arith.constant 0 : index
    %33 = tpu.strided_load %arg15[%c1_24, %c0_25] {strides = array<i32: 2, 1>} : memref<32x64xf32, #tpu.memory_space<vmem>>, vector<16x64xf32>
    %34 = arith.maximumf %32, %33 : vector<16x64xf32>
    %cst_26 = arith.constant 0.000000e+00 : f32
    %35 = vector.broadcast %cst_26 : f32 to vector<1x64xf32>
    %36 = vector.extract_strided_slice %34 {offsets = [0, 0], sizes = [15, 64], strides = [1, 1]} : vector<16x64xf32> to vector<15x64xf32>
    %37 = tpu.concatenate %35, %36 in 0 : vector<1x64xf32>, vector<15x64xf32> -> vector<16x64xf32>
    %c0_27 = arith.constant 0 : index
    %c0_28 = arith.constant 0 : index
    %38 = vector.load %arg3[%c0_27, %c0_28] : memref<16x2xf32, #tpu.memory_space<vmem>>, vector<16x1xf32>
    %39 = vector.broadcast %38 : vector<16x1xf32> to vector<16x64xf32>
    %40 = arith.mulf %37, %39 : vector<16x64xf32>
    %41 = vector.extract_strided_slice %34 {offsets = [1, 0], sizes = [15, 64], strides = [1, 1]} : vector<16x64xf32> to vector<15x64xf32>
    %42 = tpu.concatenate %41, %35 in 0 : vector<15x64xf32>, vector<1x64xf32> -> vector<16x64xf32>
    %c0_29 = arith.constant 0 : index
    %c1_30 = arith.constant 1 : index
    %43 = vector.load %arg3[%c0_29, %c1_30] : memref<16x2xf32, #tpu.memory_space<vmem>>, vector<16x1xf32>
    %44 = vector.broadcast %43 : vector<16x1xf32> to vector<16x64xf32>
    %45 = arith.mulf %42, %44 : vector<16x64xf32>
    %c1_31 = arith.constant 1 : index
    %c0_32 = arith.constant 0 : index
    %c0_33 = arith.constant 0 : index
    %46 = vector.load %arg7[%c1_31, %c0_32, %c0_33] : memref<3x64x128xf32, #tpu.memory_space<vmem>>, vector<1x64x128xf32>
    %47 = vector.shape_cast %46 : vector<1x64x128xf32> to vector<64x128xf32>
    %cst_34 = arith.constant dense<0.000000e+00> : vector<16x128xf32>
    %48 = tpu.matmul %34, %47, %cst_34 {dimension_numbers = #tpu.dot_dimension_numbers<[1], [0], [0], [1], [0, 0, 1, 1], [], []>} : vector<16x64xf32>, vector<64x128xf32>, vector<16x128xf32> -> vector<16x128xf32>
    %c0_35 = arith.constant 0 : index
    %c0_36 = arith.constant 0 : index
    %c0_37 = arith.constant 0 : index
    %49 = vector.load %arg7[%c0_35, %c0_36, %c0_37] : memref<3x64x128xf32, #tpu.memory_space<vmem>>, vector<1x64x128xf32>
    %50 = vector.shape_cast %49 : vector<1x64x128xf32> to vector<64x128xf32>
    %cst_38 = arith.constant dense<0.000000e+00> : vector<16x128xf32>
    %51 = tpu.matmul %40, %50, %cst_38 {dimension_numbers = #tpu.dot_dimension_numbers<[1], [0], [0], [1], [0, 0, 1, 1], [], []>} : vector<16x64xf32>, vector<64x128xf32>, vector<16x128xf32> -> vector<16x128xf32>
    %52 = arith.addf %48, %51 : vector<16x128xf32>
    %c2_39 = arith.constant 2 : index
    %c0_40 = arith.constant 0 : index
    %c0_41 = arith.constant 0 : index
    %53 = vector.load %arg7[%c2_39, %c0_40, %c0_41] : memref<3x64x128xf32, #tpu.memory_space<vmem>>, vector<1x64x128xf32>
    %54 = vector.shape_cast %53 : vector<1x64x128xf32> to vector<64x128xf32>
    %cst_42 = arith.constant dense<0.000000e+00> : vector<16x128xf32>
    %55 = tpu.matmul %45, %54, %cst_42 {dimension_numbers = #tpu.dot_dimension_numbers<[1], [0], [0], [1], [0, 0, 1, 1], [], []>} : vector<16x64xf32>, vector<64x128xf32>, vector<16x128xf32> -> vector<16x128xf32>
    %56 = arith.addf %52, %55 : vector<16x128xf32>
    %c0_43 = arith.constant 0 : index
    %c0_44 = arith.constant 0 : index
    %57 = vector.load %arg8[%c0_43, %c0_44] : memref<1x128xf32, #tpu.memory_space<vmem>>, vector<1x128xf32>
    %58 = vector.broadcast %57 : vector<1x128xf32> to vector<16x128xf32>
    %59 = arith.mulf %56, %58 : vector<16x128xf32>
    %c0_45 = arith.constant 0 : index
    %c0_46 = arith.constant 0 : index
    %60 = vector.load %arg9[%c0_45, %c0_46] : memref<1x128xf32, #tpu.memory_space<vmem>>, vector<1x128xf32>
    %61 = vector.broadcast %60 : vector<1x128xf32> to vector<16x128xf32>
    %62 = arith.addf %59, %61 : vector<16x128xf32>
    %cst_47 = arith.constant 0.000000e+00 : f32
    %63 = vector.broadcast %cst_47 : f32 to vector<16x128xf32>
    %64 = arith.maximumf %62, %63 : vector<16x128xf32>
    %c0_48 = arith.constant 0 : index
    %c0_49 = arith.constant 0 : index
    %65 = vector.load %arg16[%c0_48, %c0_49] : memref<16x128xf32, #tpu.memory_space<vmem>>, vector<16x128xf32>
    tpu.vector_store %arg16[%c0_48, %c0_49], %64 {strides = array<i32>} : memref<16x128xf32, #tpu.memory_space<vmem>>, vector<16x128xf32>,
    %c0_50 = arith.constant 0 : index
    %c0_51 = arith.constant 0 : index
    %66 = tpu.strided_load %arg16[%c0_50, %c0_51] {strides = array<i32: 2, 1>} : memref<16x128xf32, #tpu.memory_space<vmem>>, vector<8x128xf32>
    %c1_52 = arith.constant 1 : index
    %c0_53 = arith.constant 0 : index
    %67 = tpu.strided_load %arg16[%c1_52, %c0_53] {strides = array<i32: 2, 1>} : memref<16x128xf32, #tpu.memory_space<vmem>>, vector<8x128xf32>
    %68 = arith.maximumf %66, %67 : vector<8x128xf32>
    %c0_54 = arith.constant 0 : index
    %c0_55 = arith.constant 0 : index
    %69 = vector.load %arg17[%c0_54, %c0_55] : memref<8x128xf32, #tpu.memory_space<vmem>>, vector<8x128xf32>
    tpu.vector_store %arg17[%c0_54, %c0_55], %68 {strides = array<i32>} : memref<8x128xf32, #tpu.memory_space<vmem>>, vector<8x128xf32>,
    %c0_56 = arith.constant 0 : index
    %c0_57 = arith.constant 0 : index
    %70 = tpu.strided_load %arg17[%c0_56, %c0_57] {strides = array<i32: 4, 1>} : memref<8x128xf32, #tpu.memory_space<vmem>>, vector<2x128xf32>
    %c0_58 = arith.constant 0 : index
    %c0_59 = arith.constant 0 : index
    %c0_60 = arith.constant 0 : index
    %71 = vector.load %arg10[%c0_58, %c0_59, %c0_60] : memref<4x128x256xf32, #tpu.memory_space<vmem>>, vector<1x128x256xf32>
    %72 = vector.shape_cast %71 : vector<1x128x256xf32> to vector<128x256xf32>
    %cst_61 = arith.constant dense<0.000000e+00> : vector<2x256xf32>
    %73 = tpu.matmul %70, %72, %cst_61 {dimension_numbers = #tpu.dot_dimension_numbers<[1], [0], [0], [1], [0, 0, 1, 1], [], []>} : vector<2x128xf32>, vector<128x256xf32>, vector<2x256xf32> -> vector<2x256xf32>
    %c1_62 = arith.constant 1 : index
    %c0_63 = arith.constant 0 : index
    %74 = tpu.strided_load %arg17[%c1_62, %c0_63] {strides = array<i32: 4, 1>} : memref<8x128xf32, #tpu.memory_space<vmem>>, vector<2x128xf32>
    %c1_64 = arith.constant 1 : index
    %c0_65 = arith.constant 0 : index
    %c0_66 = arith.constant 0 : index
    %75 = vector.load %arg10[%c1_64, %c0_65, %c0_66] : memref<4x128x256xf32, #tpu.memory_space<vmem>>, vector<1x128x256xf32>
    %76 = vector.shape_cast %75 : vector<1x128x256xf32> to vector<128x256xf32>
    %cst_67 = arith.constant dense<0.000000e+00> : vector<2x256xf32>
    %77 = tpu.matmul %74, %76, %cst_67 {dimension_numbers = #tpu.dot_dimension_numbers<[1], [0], [0], [1], [0, 0, 1, 1], [], []>} : vector<2x128xf32>, vector<128x256xf32>, vector<2x256xf32> -> vector<2x256xf32>
    %78 = arith.addf %73, %77 : vector<2x256xf32>
    %c2_68 = arith.constant 2 : index
    %c0_69 = arith.constant 0 : index
    %79 = tpu.strided_load %arg17[%c2_68, %c0_69] {strides = array<i32: 4, 1>} : memref<8x128xf32, #tpu.memory_space<vmem>>, vector<2x128xf32>
    %c2_70 = arith.constant 2 : index
    %c0_71 = arith.constant 0 : index
    %c0_72 = arith.constant 0 : index
    %80 = vector.load %arg10[%c2_70, %c0_71, %c0_72] : memref<4x128x256xf32, #tpu.memory_space<vmem>>, vector<1x128x256xf32>
    %81 = vector.shape_cast %80 : vector<1x128x256xf32> to vector<128x256xf32>
    %cst_73 = arith.constant dense<0.000000e+00> : vector<2x256xf32>
    %82 = tpu.matmul %79, %81, %cst_73 {dimension_numbers = #tpu.dot_dimension_numbers<[1], [0], [0], [1], [0, 0, 1, 1], [], []>} : vector<2x128xf32>, vector<128x256xf32>, vector<2x256xf32> -> vector<2x256xf32>
    %83 = arith.addf %78, %82 : vector<2x256xf32>
    %c3 = arith.constant 3 : index
    %c0_74 = arith.constant 0 : index
    %84 = tpu.strided_load %arg17[%c3, %c0_74] {strides = array<i32: 4, 1>} : memref<8x128xf32, #tpu.memory_space<vmem>>, vector<2x128xf32>
    %c3_75 = arith.constant 3 : index
    %c0_76 = arith.constant 0 : index
    %c0_77 = arith.constant 0 : index
    %85 = vector.load %arg10[%c3_75, %c0_76, %c0_77] : memref<4x128x256xf32, #tpu.memory_space<vmem>>, vector<1x128x256xf32>
    %86 = vector.shape_cast %85 : vector<1x128x256xf32> to vector<128x256xf32>
    %cst_78 = arith.constant dense<0.000000e+00> : vector<2x256xf32>
    %87 = tpu.matmul %84, %86, %cst_78 {dimension_numbers = #tpu.dot_dimension_numbers<[1], [0], [0], [1], [0, 0, 1, 1], [], []>} : vector<2x128xf32>, vector<128x256xf32>, vector<2x256xf32> -> vector<2x256xf32>
    %88 = arith.addf %83, %87 : vector<2x256xf32>
    %c0_79 = arith.constant 0 : index
    %c0_80 = arith.constant 0 : index
    %89 = vector.load %arg11[%c0_79, %c0_80] : memref<1x256xf32, #tpu.memory_space<vmem>>, vector<1x256xf32>
    %90 = vector.broadcast %89 : vector<1x256xf32> to vector<2x256xf32>
    %91 = arith.addf %88, %90 : vector<2x256xf32>
    %cst_81 = arith.constant 0.000000e+00 : f32
    %92 = vector.broadcast %cst_81 : f32 to vector<2x256xf32>
    %93 = arith.maximumf %91, %92 : vector<2x256xf32>
    %c0_82 = arith.constant 0 : index
    %c0_83 = arith.constant 0 : index
    %94 = vector.load %arg12[%c0_82, %c0_83] : memref<256x128xf32, #tpu.memory_space<vmem>>, vector<256x128xf32>
    %cst_84 = arith.constant dense<0.000000e+00> : vector<2x128xf32>
    %95 = tpu.matmul %93, %94, %cst_84 {dimension_numbers = #tpu.dot_dimension_numbers<[1], [0], [0], [1], [0, 0, 1, 1], [], []>} : vector<2x256xf32>, vector<256x128xf32>, vector<2x128xf32> -> vector<2x128xf32>
    %c0_85 = arith.constant 0 : index
    %c0_86 = arith.constant 0 : index
    %96 = vector.load %arg13[%c0_85, %c0_86] : memref<1x128xf32, #tpu.memory_space<vmem>>, vector<1x128xf32>
    %97 = vector.broadcast %96 : vector<1x128xf32> to vector<2x128xf32>
    %98 = arith.addf %95, %97 : vector<2x128xf32>
    %c0_87 = arith.constant 0 : index
    %c0_88 = arith.constant 0 : index
    %99 = vector.load %arg14[%c0_87, %c0_88] : memref<2x128xf32, #tpu.memory_space<vmem>>, vector<2x128xf32>
    tpu.vector_store %arg14[%c0_87, %c0_88], %98 {strides = array<i32>} : memref<2x128xf32, #tpu.memory_space<vmem>>, vector<2x128xf32>,
    return
  }
  func.func @transform_0(%arg0: i32) -> (i32, i32) {
    %c0_i32 = arith.constant 0 : i32
    %c0_i32_0 = arith.constant 0 : i32
    return %arg0, %c0_i32 : i32, i32
  }
  func.func @transform_1(%arg0: i32) -> (i32, i32) {
    %c0_i32 = arith.constant 0 : i32
    %c0_i32_0 = arith.constant 0 : i32
    %c0_i32_1 = arith.constant 0 : i32
    return %c0_i32, %c0_i32_0 : i32, i32
  }
  func.func @transform_2(%arg0: i32) -> (i32, i32) {
    %c0_i32 = arith.constant 0 : i32
    %c0_i32_0 = arith.constant 0 : i32
    %c0_i32_1 = arith.constant 0 : i32
    return %c0_i32, %c0_i32_0 : i32, i32
  }
  func.func @transform_3(%arg0: i32) -> (i32, i32, i32) {
    %c0_i32 = arith.constant 0 : i32
    %c0_i32_0 = arith.constant 0 : i32
    %c0_i32_1 = arith.constant 0 : i32
    %c0_i32_2 = arith.constant 0 : i32
    return %c0_i32, %c0_i32_0, %c0_i32_1 : i32, i32, i32
  }
  func.func @transform_4(%arg0: i32) -> (i32, i32) {
    %c0_i32 = arith.constant 0 : i32
    %c0_i32_0 = arith.constant 0 : i32
    %c0_i32_1 = arith.constant 0 : i32
    return %c0_i32, %c0_i32_0 : i32, i32
  }
  func.func @transform_5(%arg0: i32) -> (i32, i32) {
    %c0_i32 = arith.constant 0 : i32
    %c0_i32_0 = arith.constant 0 : i32
    %c0_i32_1 = arith.constant 0 : i32
    return %c0_i32, %c0_i32_0 : i32, i32
  }
  func.func @transform_6(%arg0: i32) -> (i32, i32, i32) {
    %c0_i32 = arith.constant 0 : i32
    %c0_i32_0 = arith.constant 0 : i32
    %c0_i32_1 = arith.constant 0 : i32
    %c0_i32_2 = arith.constant 0 : i32
    return %c0_i32, %c0_i32_0, %c0_i32_1 : i32, i32, i32
  }
  func.func @transform_7(%arg0: i32) -> (i32, i32) {
    %c0_i32 = arith.constant 0 : i32
    %c0_i32_0 = arith.constant 0 : i32
    %c0_i32_1 = arith.constant 0 : i32
    return %c0_i32, %c0_i32_0 : i32, i32
  }
  func.func @transform_8(%arg0: i32) -> (i32, i32) {
    %c0_i32 = arith.constant 0 : i32
    %c0_i32_0 = arith.constant 0 : i32
    %c0_i32_1 = arith.constant 0 : i32
    return %c0_i32, %c0_i32_0 : i32, i32
  }
  func.func @transform_9(%arg0: i32) -> (i32, i32, i32) {
    %c0_i32 = arith.constant 0 : i32
    %c0_i32_0 = arith.constant 0 : i32
    %c0_i32_1 = arith.constant 0 : i32
    %c0_i32_2 = arith.constant 0 : i32
    return %c0_i32, %c0_i32_0, %c0_i32_1 : i32, i32, i32
  }
  func.func @transform_10(%arg0: i32) -> (i32, i32) {
    %c0_i32 = arith.constant 0 : i32
    %c0_i32_0 = arith.constant 0 : i32
    %c0_i32_1 = arith.constant 0 : i32
    return %c0_i32, %c0_i32_0 : i32, i32
  }
  func.func @transform_11(%arg0: i32) -> (i32, i32) {
    %c0_i32 = arith.constant 0 : i32
    %c0_i32_0 = arith.constant 0 : i32
    %c0_i32_1 = arith.constant 0 : i32
    return %c0_i32, %c0_i32_0 : i32, i32
  }
  func.func @transform_12(%arg0: i32) -> (i32, i32) {
    %c0_i32 = arith.constant 0 : i32
    %c0_i32_0 = arith.constant 0 : i32
    %c0_i32_1 = arith.constant 0 : i32
    return %c0_i32, %c0_i32_0 : i32, i32
  }
  func.func @transform_13(%arg0: i32) -> (i32, i32) {
    %c0_i32 = arith.constant 0 : i32
    %c0_i32_0 = arith.constant 0 : i32
    return %arg0, %c0_i32 : i32, i32
  }
}

</mosaic_0001>

<llo_original>
// kernel: tpu_custom_call.1
$region0: #{tpu_custom_call.1}
  #allocation0 [shape = 'u32[]', space=smem, size = 0x4, offset = 0x4, fixed_abs, tag = 'smem constant byte address 0x4 - core index']
  #allocation1 [shape = 'u32[144,128]{1,0:T(1,128)}', space=vmem, size = 0x12000, scoped, tag = 'internal scratch']
  #allocation2 [shape = 'f32[32,64]{1,0:T(8,128)}', space=vmem, size = 0x4000, scoped, tag = 'scratch operand']
  #allocation3 [shape = 'f32[16,128]{1,0:T(8,128)}', space=vmem, size = 0x2000, scoped, tag = 'scratch operand']
  #allocation4 [shape = 'f32[8,128]{1,0:T(8,128)}', space=vmem, size = 0x1000, scoped, tag = 'scratch operand']
  %s0 = inlined_call_operand.vmem [shape: f32[32,4], index: 0, kind: input, shape index: {}]
  %s1 = inlined_call_operand.vmem [shape: f32[32,2], index: 1, kind: input, shape index: {}]
  %s2 = inlined_call_operand.vmem [shape: f32[16,2], index: 2, kind: input, shape index: {}]
  %s3 = inlined_call_operand.vmem [shape: f32[3,4,64], index: 3, kind: input, shape index: {}]
  %s4 = inlined_call_operand.vmem [shape: f32[1,64], index: 4, kind: input, shape index: {}]
  %s5 = inlined_call_operand.vmem [shape: f32[1,64], index: 5, kind: input, shape index: {}]
  %s6 = inlined_call_operand.hbm [shape: f32[3,64,128], index: 6, kind: input, shape index: {}]
  %s7 = inlined_call_operand.vmem [shape: f32[1,128], index: 7, kind: input, shape index: {}]
  %s8 = inlined_call_operand.vmem [shape: f32[1,128], index: 8, kind: input, shape index: {}]
  %s9 = inlined_call_operand.hbm [shape: f32[4,128,256], index: 9, kind: input, shape index: {}]
  %s10 = inlined_call_operand.vmem [shape: f32[1,256], index: 10, kind: input, shape index: {}]
  %s11 = inlined_call_operand.hbm [shape: f32[256,128], index: 11, kind: input, shape index: {}]
  %s12 = inlined_call_operand.vmem [shape: f32[1,128], index: 12, kind: input, shape index: {}]
  %s13 = inlined_call_operand.hbm [shape: f32[2,128], index: 13, kind: output, shape index: {}]
  %s14 = sld [smem:[#allocation0]]
  $region74: #{tpu_custom_call.1} parent=0
    _
  %s16 = ssub.s32 1, %s14
  %s17 = scalar_select 0, %s16, %s14
  $region1: #{tpu_custom_call.1} parent=0
    #allocation5 [shape = 'u8[98304]{0}', space=vmem, size = 0x18000, scoped, tag = 'input window, operand 6, single buffered']
    #allocation6 [shape = 's32[1]{0}', space=sflag, size = 0x4, scoped, tag = 'scoped memory for tpu_custom_call.1']
    #allocation7 [shape = 's32[1]{0}', space=sflag, size = 0x4, scoped, tag = 'scoped memory for tpu_custom_call.1']
    #allocation8 [shape = 'u8[524288]{0}', space=vmem, size = 0x80000, scoped, tag = 'input window, operand 9, single buffered']
    #allocation9 [shape = 's32[1]{0}', space=sflag, size = 0x4, scoped, tag = 'scoped memory for tpu_custom_call.1']
    #allocation10 [shape = 'u8[131072]{0}', space=vmem, size = 0x20000, scoped, tag = 'input window, operand 11, single buffered']
    #allocation11 [shape = 'u8[1024]{0}', space=vmem, size = 0x400, scoped, tag = 'output window, operand 0, single buffered']
    %18 = vsyncpa [#allocation6], 0
    %19 = vsyncpa [#allocation9], 0
    %20 = vsyncpa [#allocation7], 0
    // Predicated region
    $region2: #{tpu_custom_call.1} parent=1 // pred_check
      _
    $region3: #{tpu_custom_call.1} parent=1 // pred_check_branch
      %22 = sbr.rel (0) target = $region5
    $region4: #{tpu_custom_call.1} parent=1 // pred_region
      _
    $region5: #{tpu_custom_call.1} parent=1 // pred_fallthru
      _
    // Predicated region
    $region6: #{tpu_custom_call.1} parent=1 // pred_check
      _
    $region7: #{tpu_custom_call.1} parent=1 // pred_check_branch
      %24 = sbr.rel (0) target = $region9
    $region8: #{tpu_custom_call.1} parent=1 // pred_region
      _
    $region9: #{tpu_custom_call.1} parent=1 // pred_fallthru
      _
    // Predicated region
    $region10: #{tpu_custom_call.1} parent=1 // pred_check
      _
    $region11: #{tpu_custom_call.1} parent=1 // pred_check_branch
      %26 = sbr.rel (0) target = $region13
    $region12: #{tpu_custom_call.1} parent=1 // pred_region
      _
    $region13: #{tpu_custom_call.1} parent=1 // pred_fallthru
      _
    // Predicated region
    $region14: #{tpu_custom_call.1} parent=1 // pred_check
      _
    $region15: #{tpu_custom_call.1} parent=1 // pred_check_branch
      %28 = sbr.rel (0) target = $region17
    $region16: #{tpu_custom_call.1} parent=1 // pred_region
      _
    $region17: #{tpu_custom_call.1} parent=1 // pred_fallthru
      _
    // Predicated region
    $region18: #{tpu_custom_call.1} parent=1 // pred_check
      _
    $region19: #{tpu_custom_call.1} parent=1 // pred_check_branch
      %30 = sbr.rel (0) target = $region21
    $region20: #{tpu_custom_call.1} parent=1 // pred_region
      _
    $region21: #{tpu_custom_call.1} parent=1 // pred_fallthru
      _
    // Predicated region
    $region22: #{tpu_custom_call.1} parent=1 // pred_check
      _
    $region23: #{tpu_custom_call.1} parent=1 // pred_check_branch
      %32 = sbr.rel (0) target = $region25
    $region24: #{tpu_custom_call.1} parent=1 // pred_region
      _
    $region25: #{tpu_custom_call.1} parent=1 // pred_fallthru
      _
    // Predicated region
    $region26: #{tpu_custom_call.1} parent=1 // pred_check
      _
    $region27: #{tpu_custom_call.1} parent=1 // pred_check_branch
      %34 = sbr.rel (0) target = $region29
    $region28: #{tpu_custom_call.1} parent=1 // pred_region
      %s36 = ssub.s32 3072, 3072
      %37 = vsyncadd [#allocation6], %s36
      %s38 = sshll.u32 [#allocation5], 4
      %s39 = int_to_ptr.vmem [resolvable:$true] %s38
      %44 = dma.hbm_to_vmem [thread:$0]  %s6, 3072, %s39, [#allocation6], 128, 128, 8
    $region29: #{tpu_custom_call.1} parent=1 // pred_fallthru
      _
    // Predicated region
    $region30: #{tpu_custom_call.1} parent=1 // pred_check
      _
    $region31: #{tpu_custom_call.1} parent=1 // pred_check_branch
      %46 = sbr.rel (0) target = $region33
    $region32: #{tpu_custom_call.1} parent=1 // pred_region
      _
    $region33: #{tpu_custom_call.1} parent=1 // pred_fallthru
      _
    // Predicated region
    $region34: #{tpu_custom_call.1} parent=1 // pred_check
      _
    $region35: #{tpu_custom_call.1} parent=1 // pred_check_branch
      %48 = sbr.rel (0) target = $region37
    $region36: #{tpu_custom_call.1} parent=1 // pred_region
      _
    $region37: #{tpu_custom_call.1} parent=1 // pred_fallthru
      _
    // Predicated region
    $region38: #{tpu_custom_call.1} parent=1 // pred_check
      _
    $region39: #{tpu_custom_call.1} parent=1 // pred_check_branch
      %50 = sbr.rel (0) target = $region41
    $region40: #{tpu_custom_call.1} parent=1 // pred_region
      %s52 = ssub.s32 16384, 16384
      %53 = vsyncadd [#allocation9], %s52
      %s54 = sshll.u32 [#allocation8], 4
      %s55 = int_to_ptr.vmem [resolvable:$true] %s54
      %60 = dma.hbm_to_vmem [thread:$0]  %s9, 16384, %s55, [#allocation9], 256, 256, 16
    $region41: #{tpu_custom_call.1} parent=1 // pred_fallthru
      _
    // Predicated region
    $region42: #{tpu_custom_call.1} parent=1 // pred_check
      _
    $region43: #{tpu_custom_call.1} parent=1 // pred_check_branch
      %62 = sbr.rel (0) target = $region45
    $region44: #{tpu_custom_call.1} parent=1 // pred_region
      _
    $region45: #{tpu_custom_call.1} parent=1 // pred_fallthru
      _
    // Predicated region
    $region46: #{tpu_custom_call.1} parent=1 // pred_check
      _
    $region47: #{tpu_custom_call.1} parent=1 // pred_check_branch
      %64 = sbr.rel (0) target = $region49
    $region48: #{tpu_custom_call.1} parent=1 // pred_region
      %s66 = ssub.s32 4096, 4096
      %67 = vsyncadd [#allocation9], %s66
      %s68 = sshll.u32 [#allocation10], 4
      %s69 = int_to_ptr.vmem [resolvable:$true] %s68
      %74 = dma.hbm_to_vmem [thread:$0]  %s11, 4096, %s69, [#allocation9], 128, 128, 8
    $region49: #{tpu_custom_call.1} parent=1 // pred_fallthru
      _
    // Predicated region
    $region50: #{tpu_custom_call.1} parent=1 // pred_check
      _
    $region51: #{tpu_custom_call.1} parent=1 // pred_check_branch
      %76 = sbr.rel (0) target = $region53
    $region52: #{tpu_custom_call.1} parent=1 // pred_region
      _
    $region53: #{tpu_custom_call.1} parent=1 // pred_fallthru
      _
    // Predicated region
    $region54: #{tpu_custom_call.1} parent=1 // pred_check
      _
    $region55: #{tpu_custom_call.1} parent=1 // pred_check_branch
      %78 = sbr.rel (0) target = $region57
    $region56: #{tpu_custom_call.1} parent=1 // pred_region
      %79 = dma.done [#allocation6], 3072
    $region57: #{tpu_custom_call.1} parent=1 // pred_fallthru
      _
    // Predicated region
    $region58: #{tpu_custom_call.1} parent=1 // pred_check
      _
    $region59: #{tpu_custom_call.1} parent=1 // pred_check_branch
      %81 = sbr.rel (0) target = $region61
    $region60: #{tpu_custom_call.1} parent=1 // pred_region
      %82 = dma.done [#allocation9], 16384
    $region61: #{tpu_custom_call.1} parent=1 // pred_fallthru
      _
    // Predicated region
    $region62: #{tpu_custom_call.1} parent=1 // pred_check
      _
    $region63: #{tpu_custom_call.1} parent=1 // pred_check_branch
      %84 = sbr.rel (0) target = $region65
    $region64: #{tpu_custom_call.1} parent=1 // pred_region
      %85 = dma.done [#allocation9], 4096
    $region65: #{tpu_custom_call.1} parent=1 // pred_fallthru
      _
    %v86 = vld [vmem:[%s0] sm:$0xff]
    %v87 = vld [vmem:[%s0 + $0x8] sm:$0xff]
    %v88 = vld [vmem:[%s0 + $0x10] sm:$0xff]
    %v89 = vld [vmem:[%s0 + $0x18] sm:$0xff]
    %vm94 = vcmask 1040384
    %v95 = vrot.slane %v86, 7
    %v96 = vrot.slane %v87, 7
    %v97 = vsel %vm94, %v95, %v96
    %v98 = vrot.slane %v88, 7
    %v99 = vsel %vm94, %v96, %v98
    %v100 = vrot.slane %v89, 7
    %v101 = vsel %vm94, %v98, %v100
    %v106 = vsel %vm94, 0.0, %v95
    %v107 = vld [vmem:[%s1] sm:$0xff]
    %v108 = vld [vmem:[%s1 + $0x8] sm:$0xff]
    %v109 = vld [vmem:[%s1 + $0x10] sm:$0xff]
    %v110 = vld [vmem:[%s1 + $0x18] sm:$0xff]
    %112 = vset.pattern.permute.xlu0 0
    %113 = vperm.xlu0 %112, %v107
    %v114 = vpop.permute.xlu0 %113
    %117 = vset.pattern.permute.xlu0 0
    %118 = vperm.xlu0 %117, %v108
    %v119 = vpop.permute.xlu0 %118
    %122 = vset.pattern.permute.xlu0 0
    %123 = vperm.xlu0 %122, %v109
    %v124 = vpop.permute.xlu0 %123
    %127 = vset.pattern.permute.xlu0 0
    %128 = vperm.xlu0 %127, %v110
    %v129 = vpop.permute.xlu0 %128
    %v131 = vmul.f32 %v106, %v114
    %v132 = vmul.f32 %v97, %v119
    %v133 = vmul.f32 %v99, %v124
    %v134 = vmul.f32 %v101, %v129
    %vm135 = vcmask 1046528
    %v136 = vrot.slane %v86, 1
    %v137 = vrot.slane %v87, 1
    %v138 = vsel %vm135, %v136, %v137
    %v139 = vrot.slane %v88, 1
    %v140 = vsel %vm135, %v137, %v139
    %v141 = vrot.slane %v89, 1
    %v142 = vsel %vm135, %v139, %v141
    %v147 = vsel %vm135, %v141, 0.0
    %148 = vset.pattern.permute.xlu0 1
    %149 = vperm.xlu0 %148, %v107
    %v150 = vpop.permute.xlu0 %149
    %152 = vset.pattern.permute.xlu0 1
    %153 = vperm.xlu0 %152, %v108
    %v154 = vpop.permute.xlu0 %153
    %156 = vset.pattern.permute.xlu0 1
    %157 = vperm.xlu0 %156, %v109
    %v158 = vpop.permute.xlu0 %157
    %160 = vset.pattern.permute.xlu0 1
    %161 = vperm.xlu0 %160, %v110
    %v162 = vpop.permute.xlu0 %161
    %v164 = vmul.f32 %v138, %v150
    %v165 = vmul.f32 %v140, %v154
    %v166 = vmul.f32 %v142, %v158
    %v167 = vmul.f32 %v147, %v162
    %s168 = scalar_lea.vmem %s3, 4
    %v169 = vld [vmem:[%s168] sm:$0xf]
    %v170 = vld [vmem:[%s3] sm:$0xf]
    %vm171 = vcmask 31744
    %v173 = vsel %vm171, %v131, 0
    %v176 = vsel %vm171, %v132, 0
    %v179 = vsel %vm171, %v133, 0
    %v182 = vsel %vm171, %v134, 0
    %vm184 = vcmask 1043456
    %v186 = vsel %vm184, %v170, 0
    %188 = vmatprep.subr.mxu0 0.0
    %189 = vmatpush1.msra.mxu0 %v186
    %190 = vmatprep.subr.mxu0 0.0
    %191 = vmatpush1.msra.mxu0 0.0
    %192 = vmatprep.subr.mxu0 0.0
    %193 = vmatpush1.msra.mxu0 0.0
    %194 = vmatprep.subr.mxu0 0.0
    %195 = vmatpush1.msra.mxu0 0.0
    %196 = vmatprep.subr.mxu0 0.0
    %197 = vmatpush1.msra.mxu0 0.0
    %198 = vmatprep.subr.mxu0 0.0
    %199 = vmatpush1.msra.mxu0 0.0
    %200 = vmatprep.subr.mxu0 0.0
    %201 = vmatpush1.msra.mxu0 0.0
    %202 = vmatprep.subr.mxu0 0.0
    %203 = vmatpush1.msra.mxu0 0.0
    %204 = vmatprep.subr.mxu0 0.0
    %205 = vmatpush1.msra.mxu0 0.0
    %206 = vmatprep.subr.mxu0 0.0
    %207 = vmatpush1.msra.mxu0 0.0
    %208 = vmatprep.subr.mxu0 0.0
    %209 = vmatpush1.msra.mxu0 0.0
    %210 = vmatprep.subr.mxu0 0.0
    %211 = vmatpush1.msra.mxu0 0.0
    %212 = vmatprep.subr.mxu0 0.0
    %213 = vmatpush1.msra.mxu0 0.0
    %214 = vmatprep.subr.mxu0 0.0
    %215 = vmatpush1.msra.mxu0 0.0
    %216 = vmatprep.subr.mxu0 0.0
    %217 = vmatpush1.msra.mxu0 0.0
    %218 = vmatprep.subr.mxu0 0.0
    %219 = vmatpush1.msra.mxu0 0.0
    %220 = vmatprep.subr.mxu0 0.0
    %221 = vmatpush1.msra.mxu0 0.0
    %222 = vmatprep.subr.mxu0 0.0
    %223 = vmatpush1.msra.mxu0 0.0
    %224 = vmatprep.subr.mxu0 0.0
    %225 = vmatpush1.msra.mxu0 0.0
    %226 = vmatprep.subr.mxu0 0.0
    %227 = vmatpush1.msra.mxu0 0.0
    %228 = vmatprep.subr.mxu0 0.0
    %229 = vmatpush1.msra.mxu0 0.0
    %230 = vmatprep.subr.mxu0 0.0
    %231 = vmatpush1.msra.mxu0 0.0
    %232 = vmatprep.subr.mxu0 0.0
    %233 = vmatpush1.msra.mxu0 0.0
    %234 = vmatprep.subr.mxu0 0.0
    %235 = vmatpush1.msra.mxu0 0.0
    %236 = vmatprep.subr.mxu0 0.0
    %237 = vmatpush1.msra.mxu0 0.0
    %238 = vmatprep.subr.mxu0 0.0
    %239 = vmatpush1.msra.mxu0 0.0
    %240 = vmatprep.subr.mxu0 0.0
    %241 = vmatpush1.msra.mxu0 0.0
    %242 = vmatprep.subr.mxu0 0.0
    %243 = vmatpush1.msra.mxu0 0.0
    %244 = vmatprep.subr.mxu0 0.0
    %245 = vmatpush1.msra.mxu0 0.0
    %246 = vmatprep.subr.mxu0 0.0
    %247 = vmatpush1.msra.mxu0 0.0
    %248 = vmatprep.subr.mxu0 0.0
    %249 = vmatpush1.msra.mxu0 0.0
    %250 = vmatprep.subr.mxu0 0.0
    %251 = vmatpush1.msra.mxu0 0.0
    %252 = vmatprep.mubr.f32.mxu0 0.0
    %253 = vmatmul.mubr.f32.gmra.mrb[0].mxu0 %v173
    %v254 = vpop.f32.mrb[0].mxu0
    %v255 = vadd.f32 0.0, %v254
    %v256 = vpop.f32.mrb[0].mxu0
    %257 = vmatprep.mubr.f32.mxu0 0.0
    %258 = vmatmul.mubr.f32.gmra.mrb[0].mxu0 %v176
    %v259 = vpop.f32.mrb[0].mxu0
    %v260 = vadd.f32 0.0, %v259
    %v261 = vpop.f32.mrb[0].mxu0
    %262 = vmatprep.mubr.f32.mxu0 0.0
    %263 = vmatmul.mubr.f32.gmra.mrb[0].mxu0 %v179
    %v264 = vpop.f32.mrb[0].mxu0
    %v265 = vadd.f32 0.0, %v264
    %v266 = vpop.f32.mrb[0].mxu0
    %267 = vmatprep.mubr.f32.mxu0 0.0
    %268 = vmatmul.mubr.f32.gmra.mrb[0].mxu0 %v182
    %v269 = vpop.f32.mrb[0].mxu0
    %v270 = vadd.f32 0.0, %v269
    %v271 = vpop.f32.mrb[0].mxu0
    %272 = vdwg.mxu0
    %v273 = vsel %vm171, %v86, 0
    %v275 = vsel %vm171, %v87, 0
    %v277 = vsel %vm171, %v88, 0
    %v279 = vsel %vm171, %v89, 0
    %v282 = vsel %vm184, %v169, 0
    %284 = vmatprep.subr.mxu0 0.0
    %285 = vmatpush1.msra.mxu0 %v282
    %286 = vmatprep.subr.mxu0 0.0
    %287 = vmatpush1.msra.mxu0 0.0
    %288 = vmatprep.subr.mxu0 0.0
    %289 = vmatpush1.msra.mxu0 0.0
    %290 = vmatprep.subr.mxu0 0.0
    %291 = vmatpush1.msra.mxu0 0.0
    %292 = vmatprep.subr.mxu0 0.0
    %293 = vmatpush1.msra.mxu0 0.0
    %294 = vmatprep.subr.mxu0 0.0
    %295 = vmatpush1.msra.mxu0 0.0
    %296 = vmatprep.subr.mxu0 0.0
    %297 = vmatpush1.msra.mxu0 0.0
    %298 = vmatprep.subr.mxu0 0.0
    %299 = vmatpush1.msra.mxu0 0.0
    %300 = vmatprep.subr.mxu0 0.0
    %301 = vmatpush1.msra.mxu0 0.0
    %302 = vmatprep.subr.mxu0 0.0
    %303 = vmatpush1.msra.mxu0 0.0
    %304 = vmatprep.subr.mxu0 0.0
    %305 = vmatpush1.msra.mxu0 0.0
    %306 = vmatprep.subr.mxu0 0.0
    %307 = vmatpush1.msra.mxu0 0.0
    %308 = vmatprep.subr.mxu0 0.0
    %309 = vmatpush1.msra.mxu0 0.0
    %310 = vmatprep.subr.mxu0 0.0
    %311 = vmatpush1.msra.mxu0 0.0
    %312 = vmatprep.subr.mxu0 0.0
    %313 = vmatpush1.msra.mxu0 0.0
    %314 = vmatprep.subr.mxu0 0.0
    %315 = vmatpush1.msra.mxu0 0.0
    %316 = vmatprep.subr.mxu0 0.0
    %317 = vmatpush1.msra.mxu0 0.0
    %318 = vmatprep.subr.mxu0 0.0
    %319 = vmatpush1.msra.mxu0 0.0
    %320 = vmatprep.subr.mxu0 0.0
    %321 = vmatpush1.msra.mxu0 0.0
    %322 = vmatprep.subr.mxu0 0.0
    %323 = vmatpush1.msra.mxu0 0.0
    %324 = vmatprep.subr.mxu0 0.0
    %325 = vmatpush1.msra.mxu0 0.0
    %326 = vmatprep.subr.mxu0 0.0
    %327 = vmatpush1.msra.mxu0 0.0
    %328 = vmatprep.subr.mxu0 0.0
    %329 = vmatpush1.msra.mxu0 0.0
    %330 = vmatprep.subr.mxu0 0.0
    %331 = vmatpush1.msra.mxu0 0.0
    %332 = vmatprep.subr.mxu0 0.0
    %333 = vmatpush1.msra.mxu0 0.0
    %334 = vmatprep.subr.mxu0 0.0
    %335 = vmatpush1.msra.mxu0 0.0
    %336 = vmatprep.subr.mxu0 0.0
    %337 = vmatpush1.msra.mxu0 0.0
    %338 = vmatprep.subr.mxu0 0.0
    %339 = vmatpush1.msra.mxu0 0.0
    %340 = vmatprep.subr.mxu0 0.0
    %341 = vmatpush1.msra.mxu0 0.0
    %342 = vmatprep.subr.mxu0 0.0
    %343 = vmatpush1.msra.mxu0 0.0
    %344 = vmatprep.subr.mxu0 0.0
    %345 = vmatpush1.msra.mxu0 0.0
    %346 = vmatprep.subr.mxu0 0.0
    %347 = vmatpush1.msra.mxu0 0.0
    %348 = vmatprep.mubr.f32.mxu0 0.0
    %349 = vmatmul.mubr.f32.gmra.mrb[0].mxu0 %v273
    %v350 = vpop.f32.mrb[0].mxu0
    %v351 = vadd.f32 %v255, %v350
    %v352 = vpop.f32.mrb[0].mxu0
    %353 = vmatprep.mubr.f32.mxu0 0.0
    %354 = vmatmul.mubr.f32.gmra.mrb[0].mxu0 %v275
    %v355 = vpop.f32.mrb[0].mxu0
    %v356 = vadd.f32 %v260, %v355
    %v357 = vpop.f32.mrb[0].mxu0
    %358 = vmatprep.mubr.f32.mxu0 0.0
    %359 = vmatmul.mubr.f32.gmra.mrb[0].mxu0 %v277
    %v360 = vpop.f32.mrb[0].mxu0
    %v361 = vadd.f32 %v265, %v360
    %v362 = vpop.f32.mrb[0].mxu0
    %363 = vmatprep.mubr.f32.mxu0 0.0
    %364 = vmatmul.mubr.f32.gmra.mrb[0].mxu0 %v279
    %v365 = vpop.f32.mrb[0].mxu0
    %v366 = vadd.f32 %v270, %v365
    %v367 = vpop.f32.mrb[0].mxu0
    %368 = vdwg.mxu0
    %s369 = scalar_lea.vmem %s3, 8
    %v370 = vld [vmem:[%s369] sm:$0xf]
    %v372 = vsel %vm171, %v164, 0
    %v375 = vsel %vm171, %v165, 0
    %v378 = vsel %vm171, %v166, 0
    %v381 = vsel %vm171, %v167, 0
    %v384 = vsel %vm184, %v370, 0
    %386 = vmatprep.subr.mxu0 0.0
    %387 = vmatpush1.msra.mxu0 %v384
    %388 = vmatprep.subr.mxu0 0.0
    %389 = vmatpush1.msra.mxu0 0.0
    %390 = vmatprep.subr.mxu0 0.0
    %391 = vmatpush1.msra.mxu0 0.0
    %392 = vmatprep.subr.mxu0 0.0
    %393 = vmatpush1.msra.mxu0 0.0
    %394 = vmatprep.subr.mxu0 0.0
    %395 = vmatpush1.msra.mxu0 0.0
    %396 = vmatprep.subr.mxu0 0.0
    %397 = vmatpush1.msra.mxu0 0.0
    %398 = vmatprep.subr.mxu0 0.0
    %399 = vmatpush1.msra.mxu0 0.0
    %400 = vmatprep.subr.mxu0 0.0
    %401 = vmatpush1.msra.mxu0 0.0
    %402 = vmatprep.subr.mxu0 0.0
    %403 = vmatpush1.msra.mxu0 0.0
    %404 = vmatprep.subr.mxu0 0.0
    %405 = vmatpush1.msra.mxu0 0.0
    %406 = vmatprep.subr.mxu0 0.0
    %407 = vmatpush1.msra.mxu0 0.0
    %408 = vmatprep.subr.mxu0 0.0
    %409 = vmatpush1.msra.mxu0 0.0
    %410 = vmatprep.subr.mxu0 0.0
    %411 = vmatpush1.msra.mxu0 0.0
    %412 = vmatprep.subr.mxu0 0.0
    %413 = vmatpush1.msra.mxu0 0.0
    %414 = vmatprep.subr.mxu0 0.0
    %415 = vmatpush1.msra.mxu0 0.0
    %416 = vmatprep.subr.mxu0 0.0
    %417 = vmatpush1.msra.mxu0 0.0
    %418 = vmatprep.subr.mxu0 0.0
    %419 = vmatpush1.msra.mxu0 0.0
    %420 = vmatprep.subr.mxu0 0.0
    %421 = vmatpush1.msra.mxu0 0.0
    %422 = vmatprep.subr.mxu0 0.0
    %423 = vmatpush1.msra.mxu0 0.0
    %424 = vmatprep.subr.mxu0 0.0
    %425 = vmatpush1.msra.mxu0 0.0
    %426 = vmatprep.subr.mxu0 0.0
    %427 = vmatpush1.msra.mxu0 0.0
    %428 = vmatprep.subr.mxu0 0.0
    %429 = vmatpush1.msra.mxu0 0.0
    %430 = vmatprep.subr.mxu0 0.0
    %431 = vmatpush1.msra.mxu0 0.0
    %432 = vmatprep.subr.mxu0 0.0
    %433 = vmatpush1.msra.mxu0 0.0
    %434 = vmatprep.subr.mxu0 0.0
    %435 = vmatpush1.msra.mxu0 0.0
    %436 = vmatprep.subr.mxu0 0.0
    %437 = vmatpush1.msra.mxu0 0.0
    %438 = vmatprep.subr.mxu0 0.0
    %439 = vmatpush1.msra.mxu0 0.0
    %440 = vmatprep.subr.mxu0 0.0
    %441 = vmatpush1.msra.mxu0 0.0
    %442 = vmatprep.subr.mxu0 0.0
    %443 = vmatpush1.msra.mxu0 0.0
    %444 = vmatprep.subr.mxu0 0.0
    %445 = vmatpush1.msra.mxu0 0.0
    %446 = vmatprep.subr.mxu0 0.0
    %447 = vmatpush1.msra.mxu0 0.0
    %448 = vmatprep.subr.mxu0 0.0
    %449 = vmatpush1.msra.mxu0 0.0
    %450 = vmatprep.mubr.f32.mxu0 0.0
    %451 = vmatmul.mubr.f32.gmra.mrb[0].mxu0 %v372
    %v452 = vpop.f32.mrb[0].mxu0
    %v453 = vadd.f32 0.0, %v452
    %v454 = vpop.f32.mrb[0].mxu0
    %455 = vmatprep.mubr.f32.mxu0 0.0
    %456 = vmatmul.mubr.f32.gmra.mrb[0].mxu0 %v375
    %v457 = vpop.f32.mrb[0].mxu0
    %v458 = vadd.f32 0.0, %v457
    %v459 = vpop.f32.mrb[0].mxu0
    %460 = vmatprep.mubr.f32.mxu0 0.0
    %461 = vmatmul.mubr.f32.gmra.mrb[0].mxu0 %v378
    %v462 = vpop.f32.mrb[0].mxu0
    %v463 = vadd.f32 0.0, %v462
    %v464 = vpop.f32.mrb[0].mxu0
    %465 = vmatprep.mubr.f32.mxu0 0.0
    %466 = vmatmul.mubr.f32.gmra.mrb[0].mxu0 %v381
    %v467 = vpop.f32.mrb[0].mxu0
    %v468 = vadd.f32 0.0, %v467
    %v469 = vpop.f32.mrb[0].mxu0
    %470 = vdwg.mxu0
    %v471 = vadd.f32 %v351, %v453
    %v472 = vadd.f32 %v356, %v458
    %v473 = vadd.f32 %v361, %v463
    %v474 = vadd.f32 %v366, %v468
    %v475 = vld [vmem:[%s4] sm:$0x1]
    %v477 = vlaneseq
    %v478 = vshrl.u32 %v477, 7
    %v479 = vsub.s32 0, %v478
    %v480 = vrot.slane %v475, %v479
    %v482 = vmul.f32 %v471, %v480
    %v483 = vmul.f32 %v472, %v480
    %v484 = vmul.f32 %v473, %v480
    %v485 = vmul.f32 %v474, %v480
    %v486 = vld [vmem:[%s5] sm:$0x1]
    %v488 = vlaneseq
    %v489 = vshrl.u32 %v488, 7
    %v490 = vsub.s32 0, %v489
    %v491 = vrot.slane %v486, %v490
    %v493 = vadd.f32 %v482, %v491
    %v494 = vadd.f32 %v483, %v491
    %v495 = vadd.f32 %v484, %v491
    %v496 = vadd.f32 %v485, %v491
    %v497 = vmax.f32 %v493, 0.0
    %v498 = vmax.f32 %v494, 0.0
    %v499 = vmax.f32 %v495, 0.0
    %v500 = vmax.f32 %v496, 0.0
    %vm501 = vcmask 523264
    %502 = vst.msk [vmem:[#allocation2] sm:$0xff] %vm501, %v497
    %503 = vst.msk [vmem:[#allocation2 + $0x8] sm:$0xff] %vm501, %v498
    %504 = vst.msk [vmem:[#allocation2 + $0x10] sm:$0xff] %vm501, %v499
    %505 = vst.msk [vmem:[#allocation2 + $0x18] sm:$0xff] %vm501, %v500
    %v506 = vld [vmem:[#allocation2] ss:$2 sm:$0xff]
    %s507 = scalar_lea.vmem [#allocation2], 16
    %v508 = vld [vmem:[%s507] ss:$2 sm:$0xff]
    %s509 = scalar_lea.vmem [#allocation2], 1
    %v510 = vld [vmem:[%s509] ss:$2 sm:$0xff]
    %s511 = scalar_lea.vmem [#allocation2], 17
    %v512 = vld [vmem:[%s511] ss:$2 sm:$0xff]
    %v513 = vmax.f32 %v506, %v510
    %v514 = vmax.f32 %v508, %v512
    %v517 = vrot.slane %v513, 7
    %v518 = vrot.slane %v514, 7
    %v519 = vsel %vm94, %v517, %v518
    %v522 = vsel %vm94, 0.0, %v517
    %v523 = vld [vmem:[%s2] sm:$0xff]
    %v524 = vld [vmem:[%s2 + $0x8] sm:$0xff]
    %526 = vset.pattern.permute.xlu0 0
    %527 = vperm.xlu0 %526, %v523
    %v528 = vpop.permute.xlu0 %527
    %531 = vset.pattern.permute.xlu0 0
    %532 = vperm.xlu0 %531, %v524
    %v533 = vpop.permute.xlu0 %532
    %v535 = vmul.f32 %v522, %v528
    %v536 = vmul.f32 %v519, %v533
    %v537 = vrot.slane %v513, 1
    %v538 = vrot.slane %v514, 1
    %v539 = vsel %vm135, %v537, %v538
    %v542 = vsel %vm135, %v538, 0.0
    %543 = vset.pattern.permute.xlu0 1
    %544 = vperm.xlu0 %543, %v523
    %v545 = vpop.permute.xlu0 %544
    %547 = vset.pattern.permute.xlu0 1
    %548 = vperm.xlu0 %547, %v524
    %v549 = vpop.permute.xlu0 %548
    %v551 = vmul.f32 %v539, %v545
    %v552 = vmul.f32 %v542, %v549
    %s553 = scalar_lea.vmem [#allocation5], 64
    %v554 = vld [vmem:[%s553] sm:$0xff]
    %v555 = vld [vmem:[%s553 + $0x8] sm:$0xff]
    %v556 = vld [vmem:[%s553 + $0x10] sm:$0xff]
    %v557 = vld [vmem:[%s553 + $0x18] sm:$0xff]
    %v558 = vld [vmem:[%s553 + $0x20] sm:$0xff]
    %v559 = vld [vmem:[%s553 + $0x28] sm:$0xff]
    %v560 = vld [vmem:[%s553 + $0x30] sm:$0xff]
    %v561 = vld [vmem:[%s553 + $0x38] sm:$0xff]
    %v562 = vld [vmem:[#allocation5] sm:$0xff]
    %v563 = vld [vmem:[#allocation5 + $0x8] sm:$0xff]
    %v564 = vld [vmem:[#allocation5 + $0x10] sm:$0xff]
    %v565 = vld [vmem:[#allocation5 + $0x18] sm:$0xff]
    %v566 = vld [vmem:[#allocation5 + $0x20] sm:$0xff]
    %v567 = vld [vmem:[#allocation5 + $0x28] sm:$0xff]
    %v568 = vld [vmem:[#allocation5 + $0x30] sm:$0xff]
    %v569 = vld [vmem:[#allocation5 + $0x38] sm:$0xff]
    %v571 = vsel %vm501, %v535, 0
    %v574 = vsel %vm501, %v536, 0
    %576 = vmatprep.subr.mxu0 0.0
    %577 = vmatpush1.msra.mxu0 %v562
    %578 = vmatprep.subr.mxu0 0.0
    %579 = vmatpush1.msra.mxu0 %v563
    %580 = vmatprep.subr.mxu0 0.0
    %581 = vmatpush1.msra.mxu0 %v564
    %582 = vmatprep.subr.mxu0 0.0
    %583 = vmatpush1.msra.mxu0 %v565
    %584 = vmatprep.subr.mxu0 0.0
    %585 = vmatpush1.msra.mxu0 %v566
    %586 = vmatprep.subr.mxu0 0.0
    %587 = vmatpush1.msra.mxu0 %v567
    %588 = vmatprep.subr.mxu0 0.0
    %589 = vmatpush1.msra.mxu0 %v568
    %590 = vmatprep.subr.mxu0 0.0
    %591 = vmatpush1.msra.mxu0 %v569
    %592 = vmatprep.subr.mxu0 0.0
    %593 = vmatpush1.msra.mxu0 0.0
    %594 = vmatprep.subr.mxu0 0.0
    %595 = vmatpush1.msra.mxu0 0.0
    %596 = vmatprep.subr.mxu0 0.0
    %597 = vmatpush1.msra.mxu0 0.0
    %598 = vmatprep.subr.mxu0 0.0
    %599 = vmatpush1.msra.mxu0 0.0
    %600 = vmatprep.subr.mxu0 0.0
    %601 = vmatpush1.msra.mxu0 0.0
    %602 = vmatprep.subr.mxu0 0.0
    %603 = vmatpush1.msra.mxu0 0.0
    %604 = vmatprep.subr.mxu0 0.0
    %605 = vmatpush1.msra.mxu0 0.0
    %606 = vmatprep.subr.mxu0 0.0
    %607 = vmatpush1.msra.mxu0 0.0
    %608 = vmatprep.subr.mxu0 0.0
    %609 = vmatpush1.msra.mxu0 0.0
    %610 = vmatprep.subr.mxu0 0.0
    %611 = vmatpush1.msra.mxu0 0.0
    %612 = vmatprep.subr.mxu0 0.0
    %613 = vmatpush1.msra.mxu0 0.0
    %614 = vmatprep.subr.mxu0 0.0
    %615 = vmatpush1.msra.mxu0 0.0
    %616 = vmatprep.subr.mxu0 0.0
    %617 = vmatpush1.msra.mxu0 0.0
    %618 = vmatprep.subr.mxu0 0.0
    %619 = vmatpush1.msra.mxu0 0.0
    %620 = vmatprep.subr.mxu0 0.0
    %621 = vmatpush1.msra.mxu0 0.0
    %622 = vmatprep.subr.mxu0 0.0
    %623 = vmatpush1.msra.mxu0 0.0
    %624 = vmatprep.subr.mxu0 0.0
    %625 = vmatpush1.msra.mxu0 0.0
    %626 = vmatprep.subr.mxu0 0.0
    %627 = vmatpush1.msra.mxu0 0.0
    %628 = vmatprep.subr.mxu0 0.0
    %629 = vmatpush1.msra.mxu0 0.0
    %630 = vmatprep.subr.mxu0 0.0
    %631 = vmatpush1.msra.mxu0 0.0
    %632 = vmatprep.subr.mxu0 0.0
    %633 = vmatpush1.msra.mxu0 0.0
    %634 = vmatprep.subr.mxu0 0.0
    %635 = vmatpush1.msra.mxu0 0.0
    %636 = vmatprep.subr.mxu0 0.0
    %637 = vmatpush1.msra.mxu0 0.0
    %638 = vmatprep.subr.mxu0 0.0
    %639 = vmatpush1.msra.mxu0 0.0
    %640 = vmatprep.mubr.f32.mxu0 0.0
    %641 = vmatmul.mubr.f32.gmra.mrb[0].mxu0 %v571
    %v642 = vpop.f32.mrb[0].mxu0
    %v643 = vadd.f32 0.0, %v642
    %v644 = vpop.f32.mrb[0].mxu0
    %645 = vmatprep.mubr.f32.mxu0 0.0
    %646 = vmatmul.mubr.f32.gmra.mrb[0].mxu0 %v574
    %v647 = vpop.f32.mrb[0].mxu0
    %v648 = vadd.f32 0.0, %v647
    %v649 = vpop.f32.mrb[0].mxu0
    %650 = vdwg.mxu0
    %v651 = vsel %vm501, %v513, 0
    %v653 = vsel %vm501, %v514, 0
    %655 = vmatprep.subr.mxu0 0.0
    %656 = vmatpush1.msra.mxu0 %v554
    %657 = vmatprep.subr.mxu0 0.0
    %658 = vmatpush1.msra.mxu0 %v555
    %659 = vmatprep.subr.mxu0 0.0
    %660 = vmatpush1.msra.mxu0 %v556
    %661 = vmatprep.subr.mxu0 0.0
    %662 = vmatpush1.msra.mxu0 %v557
    %663 = vmatprep.subr.mxu0 0.0
    %664 = vmatpush1.msra.mxu0 %v558
    %665 = vmatprep.subr.mxu0 0.0
    %666 = vmatpush1.msra.mxu0 %v559
    %667 = vmatprep.subr.mxu0 0.0
    %668 = vmatpush1.msra.mxu0 %v560
    %669 = vmatprep.subr.mxu0 0.0
    %670 = vmatpush1.msra.mxu0 %v561
    %671 = vmatprep.subr.mxu0 0.0
    %672 = vmatpush1.msra.mxu0 0.0
    %673 = vmatprep.subr.mxu0 0.0
    %674 = vmatpush1.msra.mxu0 0.0
    %675 = vmatprep.subr.mxu0 0.0
    %676 = vmatpush1.msra.mxu0 0.0
    %677 = vmatprep.subr.mxu0 0.0
    %678 = vmatpush1.msra.mxu0 0.0
    %679 = vmatprep.subr.mxu0 0.0
    %680 = vmatpush1.msra.mxu0 0.0
    %681 = vmatprep.subr.mxu0 0.0
    %682 = vmatpush1.msra.mxu0 0.0
    %683 = vmatprep.subr.mxu0 0.0
    %684 = vmatpush1.msra.mxu0 0.0
    %685 = vmatprep.subr.mxu0 0.0
    %686 = vmatpush1.msra.mxu0 0.0
    %687 = vmatprep.subr.mxu0 0.0
    %688 = vmatpush1.msra.mxu0 0.0
    %689 = vmatprep.subr.mxu0 0.0
    %690 = vmatpush1.msra.mxu0 0.0
    %691 = vmatprep.subr.mxu0 0.0
    %692 = vmatpush1.msra.mxu0 0.0
    %693 = vmatprep.subr.mxu0 0.0
    %694 = vmatpush1.msra.mxu0 0.0
    %695 = vmatprep.subr.mxu0 0.0
    %696 = vmatpush1.msra.mxu0 0.0
    %697 = vmatprep.subr.mxu0 0.0
    %698 = vmatpush1.msra.mxu0 0.0
    %699 = vmatprep.subr.mxu0 0.0
    %700 = vmatpush1.msra.mxu0 0.0
    %701 = vmatprep.subr.mxu0 0.0
    %702 = vmatpush1.msra.mxu0 0.0
    %703 = vmatprep.subr.mxu0 0.0
    %704 = vmatpush1.msra.mxu0 0.0
    %705 = vmatprep.subr.mxu0 0.0
    %706 = vmatpush1.msra.mxu0 0.0
    %707 = vmatprep.subr.mxu0 0.0
    %708 = vmatpush1.msra.mxu0 0.0
    %709 = vmatprep.subr.mxu0 0.0
    %710 = vmatpush1.msra.mxu0 0.0
    %711 = vmatprep.subr.mxu0 0.0
    %712 = vmatpush1.msra.mxu0 0.0
    %713 = vmatprep.subr.mxu0 0.0
    %714 = vmatpush1.msra.mxu0 0.0
    %715 = vmatprep.subr.mxu0 0.0
    %716 = vmatpush1.msra.mxu0 0.0
    %717 = vmatprep.subr.mxu0 0.0
    %718 = vmatpush1.msra.mxu0 0.0
    %719 = vmatprep.mubr.f32.mxu0 0.0
    %720 = vmatmul.mubr.f32.gmra.mrb[0].mxu0 %v651
    %v721 = vpop.f32.mrb[0].mxu0
    %v722 = vadd.f32 %v643, %v721
    %v723 = vpop.f32.mrb[0].mxu0
    %724 = vmatprep.mubr.f32.mxu0 0.0
    %725 = vmatmul.mubr.f32.gmra.mrb[0].mxu0 %v653
    %v726 = vpop.f32.mrb[0].mxu0
    %v727 = vadd.f32 %v648, %v726
    %v728 = vpop.f32.mrb[0].mxu0
    %729 = vdwg.mxu0
    %s730 = scalar_lea.vmem [#allocation5], 128
    %v731 = vld [vmem:[%s730] sm:$0xff]
    %v732 = vld [vmem:[%s730 + $0x8] sm:$0xff]
    %v733 = vld [vmem:[%s730 + $0x10] sm:$0xff]
    %v734 = vld [vmem:[%s730 + $0x18] sm:$0xff]
    %v735 = vld [vmem:[%s730 + $0x20] sm:$0xff]
    %v736 = vld [vmem:[%s730 + $0x28] sm:$0xff]
    %v737 = vld [vmem:[%s730 + $0x30] sm:$0xff]
    %v738 = vld [vmem:[%s730 + $0x38] sm:$0xff]
    %v740 = vsel %vm501, %v551, 0
    %v743 = vsel %vm501, %v552, 0
    %745 = vmatprep.subr.mxu0 0.0
    %746 = vmatpush1.msra.mxu0 %v731
    %747 = vmatprep.subr.mxu0 0.0
    %748 = vmatpush1.msra.mxu0 %v732
    %749 = vmatprep.subr.mxu0 0.0
    %750 = vmatpush1.msra.mxu0 %v733
    %751 = vmatprep.subr.mxu0 0.0
    %752 = vmatpush1.msra.mxu0 %v734
    %753 = vmatprep.subr.mxu0 0.0
    %754 = vmatpush1.msra.mxu0 %v735
    %755 = vmatprep.subr.mxu0 0.0
    %756 = vmatpush1.msra.mxu0 %v736
    %757 = vmatprep.subr.mxu0 0.0
    %758 = vmatpush1.msra.mxu0 %v737
    %759 = vmatprep.subr.mxu0 0.0
    %760 = vmatpush1.msra.mxu0 %v738
    %761 = vmatprep.subr.mxu0 0.0
    %762 = vmatpush1.msra.mxu0 0.0
    %763 = vmatprep.subr.mxu0 0.0
    %764 = vmatpush1.msra.mxu0 0.0
    %765 = vmatprep.subr.mxu0 0.0
    %766 = vmatpush1.msra.mxu0 0.0
    %767 = vmatprep.subr.mxu0 0.0
    %768 = vmatpush1.msra.mxu0 0.0
    %769 = vmatprep.subr.mxu0 0.0
    %770 = vmatpush1.msra.mxu0 0.0
    %771 = vmatprep.subr.mxu0 0.0
    %772 = vmatpush1.msra.mxu0 0.0
    %773 = vmatprep.subr.mxu0 0.0
    %774 = vmatpush1.msra.mxu0 0.0
    %775 = vmatprep.subr.mxu0 0.0
    %776 = vmatpush1.msra.mxu0 0.0
    %777 = vmatprep.subr.mxu0 0.0
    %778 = vmatpush1.msra.mxu0 0.0
    %779 = vmatprep.subr.mxu0 0.0
    %780 = vmatpush1.msra.mxu0 0.0
    %781 = vmatprep.subr.mxu0 0.0
    %782 = vmatpush1.msra.mxu0 0.0
    %783 = vmatprep.subr.mxu0 0.0
    %784 = vmatpush1.msra.mxu0 0.0
    %785 = vmatprep.subr.mxu0 0.0
    %786 = vmatpush1.msra.mxu0 0.0
    %787 = vmatprep.subr.mxu0 0.0
    %788 = vmatpush1.msra.mxu0 0.0
    %789 = vmatprep.subr.mxu0 0.0
    %790 = vmatpush1.msra.mxu0 0.0
    %791 = vmatprep.subr.mxu0 0.0
    %792 = vmatpush1.msra.mxu0 0.0
    %793 = vmatprep.subr.mxu0 0.0
    %794 = vmatpush1.msra.mxu0 0.0
    %795 = vmatprep.subr.mxu0 0.0
    %796 = vmatpush1.msra.mxu0 0.0
    %797 = vmatprep.subr.mxu0 0.0
    %798 = vmatpush1.msra.mxu0 0.0
    %799 = vmatprep.subr.mxu0 0.0
    %800 = vmatpush1.msra.mxu0 0.0
    %801 = vmatprep.subr.mxu0 0.0
    %802 = vmatpush1.msra.mxu0 0.0
    %803 = vmatprep.subr.mxu0 0.0
    %804 = vmatpush1.msra.mxu0 0.0
    %805 = vmatprep.subr.mxu0 0.0
    %806 = vmatpush1.msra.mxu0 0.0
    %807 = vmatprep.subr.mxu0 0.0
    %808 = vmatpush1.msra.mxu0 0.0
    %809 = vmatprep.mubr.f32.mxu0 0.0
    %810 = vmatmul.mubr.f32.gmra.mrb[0].mxu0 %v740
    %v811 = vpop.f32.mrb[0].mxu0
    %v812 = vadd.f32 0.0, %v811
    %v813 = vpop.f32.mrb[0].mxu0
    %814 = vmatprep.mubr.f32.mxu0 0.0
    %815 = vmatmul.mubr.f32.gmra.mrb[0].mxu0 %v743
    %v816 = vpop.f32.mrb[0].mxu0
    %v817 = vadd.f32 0.0, %v816
    %v818 = vpop.f32.mrb[0].mxu0
    %819 = vdwg.mxu0
    %v820 = vadd.f32 %v722, %v812
    %v821 = vadd.f32 %v727, %v817
    %v822 = vld [vmem:[%s7] sm:$0x1]
    %v824 = vlaneseq
    %v825 = vshrl.u32 %v824, 7
    %v826 = vsub.s32 0, %v825
    %v827 = vrot.slane %v822, %v826
    %v829 = vmul.f32 %v820, %v827
    %v830 = vmul.f32 %v821, %v827
    %v831 = vld [vmem:[%s8] sm:$0x1]
    %v833 = vlaneseq
    %v834 = vshrl.u32 %v833, 7
    %v835 = vsub.s32 0, %v834
    %v836 = vrot.slane %v831, %v835
    %v838 = vadd.f32 %v829, %v836
    %v839 = vadd.f32 %v830, %v836
    %v840 = vmax.f32 %v838, 0.0
    %v841 = vmax.f32 %v839, 0.0
    %842 = vst [vmem:[#allocation3] sm:$0xff] %v840
    %843 = vst [vmem:[#allocation3 + $0x8] sm:$0xff] %v841
    %v844 = vld [vmem:[#allocation3] ss:$2 sm:$0xff]
    %s845 = scalar_lea.vmem [#allocation3], 1
    %v846 = vld [vmem:[%s845] ss:$2 sm:$0xff]
    %v847 = vmax.f32 %v844, %v846
    %848 = vst [vmem:[#allocation4] sm:$0xff] %v847
    %v849 = vld [vmem:[#allocation4] ss:$4 sm:$0x3]
    %v850 = vld [vmem:[#allocation8] sm:$0xff]
    %v851 = vld [vmem:[#allocation8 + $0x8] sm:$0xff]
    %v852 = vld [vmem:[#allocation8 + $0x10] sm:$0xff]
    %v853 = vld [vmem:[#allocation8 + $0x18] sm:$0xff]
    %v854 = vld [vmem:[#allocation8 + $0x20] sm:$0xff]
    %v855 = vld [vmem:[#allocation8 + $0x28] sm:$0xff]
    %v856 = vld [vmem:[#allocation8 + $0x30] sm:$0xff]
    %v857 = vld [vmem:[#allocation8 + $0x38] sm:$0xff]
    %v858 = vld [vmem:[#allocation8 + $0x40] sm:$0xff]
    %v859 = vld [vmem:[#allocation8 + $0x48] sm:$0xff]
    %v860 = vld [vmem:[#allocation8 + $0x50] sm:$0xff]
    %v861 = vld [vmem:[#allocation8 + $0x58] sm:$0xff]
    %v862 = vld [vmem:[#allocation8 + $0x60] sm:$0xff]
    %v863 = vld [vmem:[#allocation8 + $0x68] sm:$0xff]
    %v864 = vld [vmem:[#allocation8 + $0x70] sm:$0xff]
    %v865 = vld [vmem:[#allocation8 + $0x78] sm:$0xff]
    %v866 = vld [vmem:[#allocation8 + $0x80] sm:$0xff]
    %v867 = vld [vmem:[#allocation8 + $0x88] sm:$0xff]
    %v868 = vld [vmem:[#allocation8 + $0x90] sm:$0xff]
    %v869 = vld [vmem:[#allocation8 + $0x98] sm:$0xff]
    %v870 = vld [vmem:[#allocation8 + $0xa0] sm:$0xff]
    %v871 = vld [vmem:[#allocation8 + $0xa8] sm:$0xff]
    %v872 = vld [vmem:[#allocation8 + $0xb0] sm:$0xff]
    %v873 = vld [vmem:[#allocation8 + $0xb8] sm:$0xff]
    %v874 = vld [vmem:[#allocation8 + $0xc0] sm:$0xff]
    %v875 = vld [vmem:[#allocation8 + $0xc8] sm:$0xff]
    %v876 = vld [vmem:[#allocation8 + $0xd0] sm:$0xff]
    %v877 = vld [vmem:[#allocation8 + $0xd8] sm:$0xff]
    %v878 = vld [vmem:[#allocation8 + $0xe0] sm:$0xff]
    %v879 = vld [vmem:[#allocation8 + $0xe8] sm:$0xff]
    %v880 = vld [vmem:[#allocation8 + $0xf0] sm:$0xff]
    %v881 = vld [vmem:[#allocation8 + $0xf8] sm:$0xff]
    %s882 = scalar_lea.vmem [#allocation4], 1
    %v883 = vld [vmem:[%s882] ss:$4 sm:$0x3]
    %s884 = scalar_lea.vmem [#allocation8], 256
    %v885 = vld [vmem:[%s884] sm:$0xff]
    %v886 = vld [vmem:[%s884 + $0x8] sm:$0xff]
    %v887 = vld [vmem:[%s884 + $0x10] sm:$0xff]
    %v888 = vld [vmem:[%s884 + $0x18] sm:$0xff]
    %v889 = vld [vmem:[%s884 + $0x20] sm:$0xff]
    %v890 = vld [vmem:[%s884 + $0x28] sm:$0xff]
    %v891 = vld [vmem:[%s884 + $0x30] sm:$0xff]
    %v892 = vld [vmem:[%s884 + $0x38] sm:$0xff]
    %v893 = vld [vmem:[%s884 + $0x40] sm:$0xff]
    %v894 = vld [vmem:[%s884 + $0x48] sm:$0xff]
    %v895 = vld [vmem:[%s884 + $0x50] sm:$0xff]
    %v896 = vld [vmem:[%s884 + $0x58] sm:$0xff]
    %v897 = vld [vmem:[%s884 + $0x60] sm:$0xff]
    %v898 = vld [vmem:[%s884 + $0x68] sm:$0xff]
    %v899 = vld [vmem:[%s884 + $0x70] sm:$0xff]
    %v900 = vld [vmem:[%s884 + $0x78] sm:$0xff]
    %v901 = vld [vmem:[%s884 + $0x80] sm:$0xff]
    %v902 = vld [vmem:[%s884 + $0x88] sm:$0xff]
    %v903 = vld [vmem:[%s884 + $0x90] sm:$0xff]
    %v904 = vld [vmem:[%s884 + $0x98] sm:$0xff]
    %v905 = vld [vmem:[%s884 + $0xa0] sm:$0xff]
    %v906 = vld [vmem:[%s884 + $0xa8] sm:$0xff]
    %v907 = vld [vmem:[%s884 + $0xb0] sm:$0xff]
    %v908 = vld [vmem:[%s884 + $0xb8] sm:$0xff]
    %v909 = vld [vmem:[%s884 + $0xc0] sm:$0xff]
    %v910 = vld [vmem:[%s884 + $0xc8] sm:$0xff]
    %v911 = vld [vmem:[%s884 + $0xd0] sm:$0xff]
    %v912 = vld [vmem:[%s884 + $0xd8] sm:$0xff]
    %v913 = vld [vmem:[%s884 + $0xe0] sm:$0xff]
    %v914 = vld [vmem:[%s884 + $0xe8] sm:$0xff]
    %v915 = vld [vmem:[%s884 + $0xf0] sm:$0xff]
    %v916 = vld [vmem:[%s884 + $0xf8] sm:$0xff]
    %917 = vmatprep.subr.mxu0 %v886
    %918 = vmatpush1.msra.mxu0 %v885
    %919 = vmatprep.subr.mxu0 %v888
    %920 = vmatpush1.msra.mxu0 %v887
    %921 = vmatprep.subr.mxu0 %v890
    %922 = vmatpush1.msra.mxu0 %v889
    %923 = vmatprep.subr.mxu0 %v892
    %924 = vmatpush1.msra.mxu0 %v891
    %925 = vmatprep.subr.mxu0 %v894
    %926 = vmatpush1.msra.mxu0 %v893
    %927 = vmatprep.subr.mxu0 %v896
    %928 = vmatpush1.msra.mxu0 %v895
    %929 = vmatprep.subr.mxu0 %v898
    %930 = vmatpush1.msra.mxu0 %v897
    %931 = vmatprep.subr.mxu0 %v900
    %932 = vmatpush1.msra.mxu0 %v899
    %933 = vmatprep.subr.mxu0 %v902
    %934 = vmatpush1.msra.mxu0 %v901
    %935 = vmatprep.subr.mxu0 %v904
    %936 = vmatpush1.msra.mxu0 %v903
    %937 = vmatprep.subr.mxu0 %v906
    %938 = vmatpush1.msra.mxu0 %v905
    %939 = vmatprep.subr.mxu0 %v908
    %940 = vmatpush1.msra.mxu0 %v907
    %941 = vmatprep.subr.mxu0 %v910
    %942 = vmatpush1.msra.mxu0 %v909
    %943 = vmatprep.subr.mxu0 %v912
    %944 = vmatpush1.msra.mxu0 %v911
    %945 = vmatprep.subr.mxu0 %v914
    %946 = vmatpush1.msra.mxu0 %v913
    %947 = vmatprep.subr.mxu0 %v916
    %948 = vmatpush1.msra.mxu0 %v915
    %949 = vmatprep.subr.mxu0 0.0
    %950 = vmatpush1.msra.mxu0 0.0
    %951 = vmatprep.subr.mxu0 0.0
    %952 = vmatpush1.msra.mxu0 0.0
    %953 = vmatprep.subr.mxu0 0.0
    %954 = vmatpush1.msra.mxu0 0.0
    %955 = vmatprep.subr.mxu0 0.0
    %956 = vmatpush1.msra.mxu0 0.0
    %957 = vmatprep.subr.mxu0 0.0
    %958 = vmatpush1.msra.mxu0 0.0
    %959 = vmatprep.subr.mxu0 0.0
    %960 = vmatpush1.msra.mxu0 0.0
    %961 = vmatprep.subr.mxu0 0.0
    %962 = vmatpush1.msra.mxu0 0.0
    %963 = vmatprep.subr.mxu0 0.0
    %964 = vmatpush1.msra.mxu0 0.0
    %965 = vmatprep.subr.mxu0 0.0
    %966 = vmatpush1.msra.mxu0 0.0
    %967 = vmatprep.subr.mxu0 0.0
    %968 = vmatpush1.msra.mxu0 0.0
    %969 = vmatprep.subr.mxu0 0.0
    %970 = vmatpush1.msra.mxu0 0.0
    %971 = vmatprep.subr.mxu0 0.0
    %972 = vmatpush1.msra.mxu0 0.0
    %973 = vmatprep.subr.mxu0 0.0
    %974 = vmatpush1.msra.mxu0 0.0
    %975 = vmatprep.subr.mxu0 0.0
    %976 = vmatpush1.msra.mxu0 0.0
    %977 = vmatprep.subr.mxu0 0.0
    %978 = vmatpush1.msra.mxu0 0.0
    %979 = vmatprep.subr.mxu0 0.0
    %980 = vmatpush1.msra.mxu0 0.0
    %981 = vmatprep.mubr.f32.mxu0 0.0
    %982 = vmatmul.mubr.f32.gmra.mrb[0].mxu0 %v883
    %v983 = vpop.f32.mrb[0].mxu0
    %v984 = vadd.f32 0.0, %v983
    %v985 = vpop.f32.mrb[0].mxu0
    %v986 = vadd.f32 0.0, %v985
    %987 = vdwg.mxu0
    %988 = vmatprep.subr.mxu0 %v851
    %989 = vmatpush1.msra.mxu0 %v850
    %990 = vmatprep.subr.mxu0 %v853
    %991 = vmatpush1.msra.mxu0 %v852
    %992 = vmatprep.subr.mxu0 %v855
    %993 = vmatpush1.msra.mxu0 %v854
    %994 = vmatprep.subr.mxu0 %v857
    %995 = vmatpush1.msra.mxu0 %v856
    %996 = vmatprep.subr.mxu0 %v859
    %997 = vmatpush1.msra.mxu0 %v858
    %998 = vmatprep.subr.mxu0 %v861
    %999 = vmatpush1.msra.mxu0 %v860
    %1000 = vmatprep.subr.mxu0 %v863
    %1001 = vmatpush1.msra.mxu0 %v862
    %1002 = vmatprep.subr.mxu0 %v865
    %1003 = vmatpush1.msra.mxu0 %v864
    %1004 = vmatprep.subr.mxu0 %v867
    %1005 = vmatpush1.msra.mxu0 %v866
    %1006 = vmatprep.subr.mxu0 %v869
    %1007 = vmatpush1.msra.mxu0 %v868
    %1008 = vmatprep.subr.mxu0 %v871
    %1009 = vmatpush1.msra.mxu0 %v870
    %1010 = vmatprep.subr.mxu0 %v873
    %1011 = vmatpush1.msra.mxu0 %v872
    %1012 = vmatprep.subr.mxu0 %v875
    %1013 = vmatpush1.msra.mxu0 %v874
    %1014 = vmatprep.subr.mxu0 %v877
    %1015 = vmatpush1.msra.mxu0 %v876
    %1016 = vmatprep.subr.mxu0 %v879
    %1017 = vmatpush1.msra.mxu0 %v878
    %1018 = vmatprep.subr.mxu0 %v881
    %1019 = vmatpush1.msra.mxu0 %v880
    %1020 = vmatprep.subr.mxu0 0.0
    %1021 = vmatpush1.msra.mxu0 0.0
    %1022 = vmatprep.subr.mxu0 0.0
    %1023 = vmatpush1.msra.mxu0 0.0
    %1024 = vmatprep.subr.mxu0 0.0
    %1025 = vmatpush1.msra.mxu0 0.0
    %1026 = vmatprep.subr.mxu0 0.0
    %1027 = vmatpush1.msra.mxu0 0.0
    %1028 = vmatprep.subr.mxu0 0.0
    %1029 = vmatpush1.msra.mxu0 0.0
    %1030 = vmatprep.subr.mxu0 0.0
    %1031 = vmatpush1.msra.mxu0 0.0
    %1032 = vmatprep.subr.mxu0 0.0
    %1033 = vmatpush1.msra.mxu0 0.0
    %1034 = vmatprep.subr.mxu0 0.0
    %1035 = vmatpush1.msra.mxu0 0.0
    %1036 = vmatprep.subr.mxu0 0.0
    %1037 = vmatpush1.msra.mxu0 0.0
    %1038 = vmatprep.subr.mxu0 0.0
    %1039 = vmatpush1.msra.mxu0 0.0
    %1040 = vmatprep.subr.mxu0 0.0
    %1041 = vmatpush1.msra.mxu0 0.0
    %1042 = vmatprep.subr.mxu0 0.0
    %1043 = vmatpush1.msra.mxu0 0.0
    %1044 = vmatprep.subr.mxu0 0.0
    %1045 = vmatpush1.msra.mxu0 0.0
    %1046 = vmatprep.subr.mxu0 0.0
    %1047 = vmatpush1.msra.mxu0 0.0
    %1048 = vmatprep.subr.mxu0 0.0
    %1049 = vmatpush1.msra.mxu0 0.0
    %1050 = vmatprep.subr.mxu0 0.0
    %1051 = vmatpush1.msra.mxu0 0.0
    %1052 = vmatprep.mubr.f32.mxu0 0.0
    %1053 = vmatmul.mubr.f32.gmra.mrb[0].mxu0 %v849
    %v1054 = vpop.f32.mrb[0].mxu0
    %v1055 = vadd.f32 %v984, %v1054
    %v1056 = vpop.f32.mrb[0].mxu0
    %v1057 = vadd.f32 %v986, %v1056
    %1058 = vdwg.mxu0
    %s1059 = scalar_lea.vmem [#allocation4], 2
    %v1060 = vld [vmem:[%s1059] ss:$4 sm:$0x3]
    %s1061 = scalar_lea.vmem [#allocation8], 512
    %v1062 = vld [vmem:[%s1061] sm:$0xff]
    %v1063 = vld [vmem:[%s1061 + $0x8] sm:$0xff]
    %v1064 = vld [vmem:[%s1061 + $0x10] sm:$0xff]
    %v1065 = vld [vmem:[%s1061 + $0x18] sm:$0xff]
    %v1066 = vld [vmem:[%s1061 + $0x20] sm:$0xff]
    %v1067 = vld [vmem:[%s1061 + $0x28] sm:$0xff]
    %v1068 = vld [vmem:[%s1061 + $0x30] sm:$0xff]
    %v1069 = vld [vmem:[%s1061 + $0x38] sm:$0xff]
    %v1070 = vld [vmem:[%s1061 + $0x40] sm:$0xff]
    %v1071 = vld [vmem:[%s1061 + $0x48] sm:$0xff]
    %v1072 = vld [vmem:[%s1061 + $0x50] sm:$0xff]
    %v1073 = vld [vmem:[%s1061 + $0x58] sm:$0xff]
    %v1074 = vld [vmem:[%s1061 + $0x60] sm:$0xff]
    %v1075 = vld [vmem:[%s1061 + $0x68] sm:$0xff]
    %v1076 = vld [vmem:[%s1061 + $0x70] sm:$0xff]
    %v1077 = vld [vmem:[%s1061 + $0x78] sm:$0xff]
    %v1078 = vld [vmem:[%s1061 + $0x80] sm:$0xff]
    %v1079 = vld [vmem:[%s1061 + $0x88] sm:$0xff]
    %v1080 = vld [vmem:[%s1061 + $0x90] sm:$0xff]
    %v1081 = vld [vmem:[%s1061 + $0x98] sm:$0xff]
    %v1082 = vld [vmem:[%s1061 + $0xa0] sm:$0xff]
    %v1083 = vld [vmem:[%s1061 + $0xa8] sm:$0xff]
    %v1084 = vld [vmem:[%s1061 + $0xb0] sm:$0xff]
    %v1085 = vld [vmem:[%s1061 + $0xb8] sm:$0xff]
    %v1086 = vld [vmem:[%s1061 + $0xc0] sm:$0xff]
    %v1087 = vld [vmem:[%s1061 + $0xc8] sm:$0xff]
    %v1088 = vld [vmem:[%s1061 + $0xd0] sm:$0xff]
    %v1089 = vld [vmem:[%s1061 + $0xd8] sm:$0xff]
    %v1090 = vld [vmem:[%s1061 + $0xe0] sm:$0xff]
    %v1091 = vld [vmem:[%s1061 + $0xe8] sm:$0xff]
    %v1092 = vld [vmem:[%s1061 + $0xf0] sm:$0xff]
    %v1093 = vld [vmem:[%s1061 + $0xf8] sm:$0xff]
    %1094 = vmatprep.subr.mxu0 %v1063
    %1095 = vmatpush1.msra.mxu0 %v1062
    %1096 = vmatprep.subr.mxu0 %v1065
    %1097 = vmatpush1.msra.mxu0 %v1064
    %1098 = vmatprep.subr.mxu0 %v1067
    %1099 = vmatpush1.msra.mxu0 %v1066
    %1100 = vmatprep.subr.mxu0 %v1069
    %1101 = vmatpush1.msra.mxu0 %v1068
    %1102 = vmatprep.subr.mxu0 %v1071
    %1103 = vmatpush1.msra.mxu0 %v1070
    %1104 = vmatprep.subr.mxu0 %v1073
    %1105 = vmatpush1.msra.mxu0 %v1072
    %1106 = vmatprep.subr.mxu0 %v1075
    %1107 = vmatpush1.msra.mxu0 %v1074
    %1108 = vmatprep.subr.mxu0 %v1077
    %1109 = vmatpush1.msra.mxu0 %v1076
    %1110 = vmatprep.subr.mxu0 %v1079
    %1111 = vmatpush1.msra.mxu0 %v1078
    %1112 = vmatprep.subr.mxu0 %v1081
    %1113 = vmatpush1.msra.mxu0 %v1080
    %1114 = vmatprep.subr.mxu0 %v1083
    %1115 = vmatpush1.msra.mxu0 %v1082
    %1116 = vmatprep.subr.mxu0 %v1085
    %1117 = vmatpush1.msra.mxu0 %v1084
    %1118 = vmatprep.subr.mxu0 %v1087
    %1119 = vmatpush1.msra.mxu0 %v1086
    %1120 = vmatprep.subr.mxu0 %v1089
    %1121 = vmatpush1.msra.mxu0 %v1088
    %1122 = vmatprep.subr.mxu0 %v1091
    %1123 = vmatpush1.msra.mxu0 %v1090
    %1124 = vmatprep.subr.mxu0 %v1093
    %1125 = vmatpush1.msra.mxu0 %v1092
    %1126 = vmatprep.subr.mxu0 0.0
    %1127 = vmatpush1.msra.mxu0 0.0
    %1128 = vmatprep.subr.mxu0 0.0
    %1129 = vmatpush1.msra.mxu0 0.0
    %1130 = vmatprep.subr.mxu0 0.0
    %1131 = vmatpush1.msra.mxu0 0.0
    %1132 = vmatprep.subr.mxu0 0.0
    %1133 = vmatpush1.msra.mxu0 0.0
    %1134 = vmatprep.subr.mxu0 0.0
    %1135 = vmatpush1.msra.mxu0 0.0
    %1136 = vmatprep.subr.mxu0 0.0
    %1137 = vmatpush1.msra.mxu0 0.0
    %1138 = vmatprep.subr.mxu0 0.0
    %1139 = vmatpush1.msra.mxu0 0.0
    %1140 = vmatprep.subr.mxu0 0.0
    %1141 = vmatpush1.msra.mxu0 0.0
    %1142 = vmatprep.subr.mxu0 0.0
    %1143 = vmatpush1.msra.mxu0 0.0
    %1144 = vmatprep.subr.mxu0 0.0
    %1145 = vmatpush1.msra.mxu0 0.0
    %1146 = vmatprep.subr.mxu0 0.0
    %1147 = vmatpush1.msra.mxu0 0.0
    %1148 = vmatprep.subr.mxu0 0.0
    %1149 = vmatpush1.msra.mxu0 0.0
    %1150 = vmatprep.subr.mxu0 0.0
    %1151 = vmatpush1.msra.mxu0 0.0
    %1152 = vmatprep.subr.mxu0 0.0
    %1153 = vmatpush1.msra.mxu0 0.0
    %1154 = vmatprep.subr.mxu0 0.0
    %1155 = vmatpush1.msra.mxu0 0.0
    %1156 = vmatprep.subr.mxu0 0.0
    %1157 = vmatpush1.msra.mxu0 0.0
    %1158 = vmatprep.mubr.f32.mxu0 0.0
    %1159 = vmatmul.mubr.f32.gmra.mrb[0].mxu0 %v1060
    %v1160 = vpop.f32.mrb[0].mxu0
    %v1161 = vadd.f32 0.0, %v1160
    %v1162 = vpop.f32.mrb[0].mxu0
    %v1163 = vadd.f32 0.0, %v1162
    %1164 = vdwg.mxu0
    %v1165 = vadd.f32 %v1055, %v1161
    %v1166 = vadd.f32 %v1057, %v1163
    %s1167 = scalar_lea.vmem [#allocation4], 3
    %v1168 = vld [vmem:[%s1167] ss:$4 sm:$0x3]
    %s1169 = scalar_lea.vmem [#allocation8], 768
    %v1170 = vld [vmem:[%s1169] sm:$0xff]
    %v1171 = vld [vmem:[%s1169 + $0x8] sm:$0xff]
    %v1172 = vld [vmem:[%s1169 + $0x10] sm:$0xff]
    %v1173 = vld [vmem:[%s1169 + $0x18] sm:$0xff]
    %v1174 = vld [vmem:[%s1169 + $0x20] sm:$0xff]
    %v1175 = vld [vmem:[%s1169 + $0x28] sm:$0xff]
    %v1176 = vld [vmem:[%s1169 + $0x30] sm:$0xff]
    %v1177 = vld [vmem:[%s1169 + $0x38] sm:$0xff]
    %v1178 = vld [vmem:[%s1169 + $0x40] sm:$0xff]
    %v1179 = vld [vmem:[%s1169 + $0x48] sm:$0xff]
    %v1180 = vld [vmem:[%s1169 + $0x50] sm:$0xff]
    %v1181 = vld [vmem:[%s1169 + $0x58] sm:$0xff]
    %v1182 = vld [vmem:[%s1169 + $0x60] sm:$0xff]
    %v1183 = vld [vmem:[%s1169 + $0x68] sm:$0xff]
    %v1184 = vld [vmem:[%s1169 + $0x70] sm:$0xff]
    %v1185 = vld [vmem:[%s1169 + $0x78] sm:$0xff]
    %v1186 = vld [vmem:[%s1169 + $0x80] sm:$0xff]
    %v1187 = vld [vmem:[%s1169 + $0x88] sm:$0xff]
    %v1188 = vld [vmem:[%s1169 + $0x90] sm:$0xff]
    %v1189 = vld [vmem:[%s1169 + $0x98] sm:$0xff]
    %v1190 = vld [vmem:[%s1169 + $0xa0] sm:$0xff]
    %v1191 = vld [vmem:[%s1169 + $0xa8] sm:$0xff]
    %v1192 = vld [vmem:[%s1169 + $0xb0] sm:$0xff]
    %v1193 = vld [vmem:[%s1169 + $0xb8] sm:$0xff]
    %v1194 = vld [vmem:[%s1169 + $0xc0] sm:$0xff]
    %v1195 = vld [vmem:[%s1169 + $0xc8] sm:$0xff]
    %v1196 = vld [vmem:[%s1169 + $0xd0] sm:$0xff]
    %v1197 = vld [vmem:[%s1169 + $0xd8] sm:$0xff]
    %v1198 = vld [vmem:[%s1169 + $0xe0] sm:$0xff]
    %v1199 = vld [vmem:[%s1169 + $0xe8] sm:$0xff]
    %v1200 = vld [vmem:[%s1169 + $0xf0] sm:$0xff]
    %v1201 = vld [vmem:[%s1169 + $0xf8] sm:$0xff]
    %1202 = vmatprep.subr.mxu0 %v1171
    %1203 = vmatpush1.msra.mxu0 %v1170
    %1204 = vmatprep.subr.mxu0 %v1173
    %1205 = vmatpush1.msra.mxu0 %v1172
    %1206 = vmatprep.subr.mxu0 %v1175
    %1207 = vmatpush1.msra.mxu0 %v1174
    %1208 = vmatprep.subr.mxu0 %v1177
    %1209 = vmatpush1.msra.mxu0 %v1176
    %1210 = vmatprep.subr.mxu0 %v1179
    %1211 = vmatpush1.msra.mxu0 %v1178
    %1212 = vmatprep.subr.mxu0 %v1181
    %1213 = vmatpush1.msra.mxu0 %v1180
    %1214 = vmatprep.subr.mxu0 %v1183
    %1215 = vmatpush1.msra.mxu0 %v1182
    %1216 = vmatprep.subr.mxu0 %v1185
    %1217 = vmatpush1.msra.mxu0 %v1184
    %1218 = vmatprep.subr.mxu0 %v1187
    %1219 = vmatpush1.msra.mxu0 %v1186
    %1220 = vmatprep.subr.mxu0 %v1189
    %1221 = vmatpush1.msra.mxu0 %v1188
    %1222 = vmatprep.subr.mxu0 %v1191
    %1223 = vmatpush1.msra.mxu0 %v1190
    %1224 = vmatprep.subr.mxu0 %v1193
    %1225 = vmatpush1.msra.mxu0 %v1192
    %1226 = vmatprep.subr.mxu0 %v1195
    %1227 = vmatpush1.msra.mxu0 %v1194
    %1228 = vmatprep.subr.mxu0 %v1197
    %1229 = vmatpush1.msra.mxu0 %v1196
    %1230 = vmatprep.subr.mxu0 %v1199
    %1231 = vmatpush1.msra.mxu0 %v1198
    %1232 = vmatprep.subr.mxu0 %v1201
    %1233 = vmatpush1.msra.mxu0 %v1200
    %1234 = vmatprep.subr.mxu0 0.0
    %1235 = vmatpush1.msra.mxu0 0.0
    %1236 = vmatprep.subr.mxu0 0.0
    %1237 = vmatpush1.msra.mxu0 0.0
    %1238 = vmatprep.subr.mxu0 0.0
    %1239 = vmatpush1.msra.mxu0 0.0
    %1240 = vmatprep.subr.mxu0 0.0
    %1241 = vmatpush1.msra.mxu0 0.0
    %1242 = vmatprep.subr.mxu0 0.0
    %1243 = vmatpush1.msra.mxu0 0.0
    %1244 = vmatprep.subr.mxu0 0.0
    %1245 = vmatpush1.msra.mxu0 0.0
    %1246 = vmatprep.subr.mxu0 0.0
    %1247 = vmatpush1.msra.mxu0 0.0
    %1248 = vmatprep.subr.mxu0 0.0
    %1249 = vmatpush1.msra.mxu0 0.0
    %1250 = vmatprep.subr.mxu0 0.0
    %1251 = vmatpush1.msra.mxu0 0.0
    %1252 = vmatprep.subr.mxu0 0.0
    %1253 = vmatpush1.msra.mxu0 0.0
    %1254 = vmatprep.subr.mxu0 0.0
    %1255 = vmatpush1.msra.mxu0 0.0
    %1256 = vmatprep.subr.mxu0 0.0
    %1257 = vmatpush1.msra.mxu0 0.0
    %1258 = vmatprep.subr.mxu0 0.0
    %1259 = vmatpush1.msra.mxu0 0.0
    %1260 = vmatprep.subr.mxu0 0.0
    %1261 = vmatpush1.msra.mxu0 0.0
    %1262 = vmatprep.subr.mxu0 0.0
    %1263 = vmatpush1.msra.mxu0 0.0
    %1264 = vmatprep.subr.mxu0 0.0
    %1265 = vmatpush1.msra.mxu0 0.0
    %1266 = vmatprep.mubr.f32.mxu0 0.0
    %1267 = vmatmul.mubr.f32.gmra.mrb[0].mxu0 %v1168
    %v1268 = vpop.f32.mrb[0].mxu0
    %v1269 = vadd.f32 0.0, %v1268
    %v1270 = vpop.f32.mrb[0].mxu0
    %v1271 = vadd.f32 0.0, %v1270
    %1272 = vdwg.mxu0
    %v1273 = vadd.f32 %v1165, %v1269
    %v1274 = vadd.f32 %v1166, %v1271
    %v1275 = vld [vmem:[%s10] sm:$0x3]
    %v1277 = vlaneseq
    %v1278 = vshrl.u32 %v1277, 7
    %v1279 = vsub.s32 0, %v1278
    %v1280 = vrot.slane %v1275, %v1279
    %v1281 = vlaneseq
    %v1282 = vshrl.u32 %v1281, 7
    %v1283 = vsub.s32 1, %v1282
    %v1284 = vrot.slane %v1275, %v1283
    %v1287 = vadd.f32 %v1273, %v1280
    %v1288 = vadd.f32 %v1274, %v1284
    %v1289 = vmax.f32 %v1287, 0.0
    %v1290 = vmax.f32 %v1288, 0.0
    %v1291 = vld [vmem:[#allocation10] sm:$0xff]
    %v1292 = vld [vmem:[#allocation10 + $0x8] sm:$0xff]
    %v1293 = vld [vmem:[#allocation10 + $0x10] sm:$0xff]
    %v1294 = vld [vmem:[#allocation10 + $0x18] sm:$0xff]
    %v1295 = vld [vmem:[#allocation10 + $0x20] sm:$0xff]
    %v1296 = vld [vmem:[#allocation10 + $0x28] sm:$0xff]
    %v1297 = vld [vmem:[#allocation10 + $0x30] sm:$0xff]
    %v1298 = vld [vmem:[#allocation10 + $0x38] sm:$0xff]
    %v1299 = vld [vmem:[#allocation10 + $0x40] sm:$0xff]
    %v1300 = vld [vmem:[#allocation10 + $0x48] sm:$0xff]
    %v1301 = vld [vmem:[#allocation10 + $0x50] sm:$0xff]
    %v1302 = vld [vmem:[#allocation10 + $0x58] sm:$0xff]
    %v1303 = vld [vmem:[#allocation10 + $0x60] sm:$0xff]
    %v1304 = vld [vmem:[#allocation10 + $0x68] sm:$0xff]
    %v1305 = vld [vmem:[#allocation10 + $0x70] sm:$0xff]
    %v1306 = vld [vmem:[#allocation10 + $0x78] sm:$0xff]
    %v1307 = vld [vmem:[#allocation10 + $0x80] sm:$0xff]
    %v1308 = vld [vmem:[#allocation10 + $0x88] sm:$0xff]
    %v1309 = vld [vmem:[#allocation10 + $0x90] sm:$0xff]
    %v1310 = vld [vmem:[#allocation10 + $0x98] sm:$0xff]
    %v1311 = vld [vmem:[#allocation10 + $0xa0] sm:$0xff]
    %v1312 = vld [vmem:[#allocation10 + $0xa8] sm:$0xff]
    %v1313 = vld [vmem:[#allocation10 + $0xb0] sm:$0xff]
    %v1314 = vld [vmem:[#allocation10 + $0xb8] sm:$0xff]
    %v1315 = vld [vmem:[#allocation10 + $0xc0] sm:$0xff]
    %v1316 = vld [vmem:[#allocation10 + $0xc8] sm:$0xff]
    %v1317 = vld [vmem:[#allocation10 + $0xd0] sm:$0xff]
    %v1318 = vld [vmem:[#allocation10 + $0xd8] sm:$0xff]
    %v1319 = vld [vmem:[#allocation10 + $0xe0] sm:$0xff]
    %v1320 = vld [vmem:[#allocation10 + $0xe8] sm:$0xff]
    %v1321 = vld [vmem:[#allocation10 + $0xf0] sm:$0xff]
    %v1322 = vld [vmem:[#allocation10 + $0xf8] sm:$0xff]
    %v1323 = vld [vmem:[%s12] sm:$0x1]
    %v1325 = vlaneseq
    %v1326 = vshrl.u32 %v1325, 7
    %v1327 = vsub.s32 0, %v1326
    %v1328 = vrot.slane %v1323, %v1327
    %1330 = vmatprep.subr.mxu0 0.0
    %1331 = vmatpush1.msra.mxu0 %v1291
    %1332 = vmatprep.subr.mxu0 0.0
    %1333 = vmatpush1.msra.mxu0 %v1292
    %1334 = vmatprep.subr.mxu0 0.0
    %1335 = vmatpush1.msra.mxu0 %v1293
    %1336 = vmatprep.subr.mxu0 0.0
    %1337 = vmatpush1.msra.mxu0 %v1294
    %1338 = vmatprep.subr.mxu0 0.0
    %1339 = vmatpush1.msra.mxu0 %v1295
    %1340 = vmatprep.subr.mxu0 0.0
    %1341 = vmatpush1.msra.mxu0 %v1296
    %1342 = vmatprep.subr.mxu0 0.0
    %1343 = vmatpush1.msra.mxu0 %v1297
    %1344 = vmatprep.subr.mxu0 0.0
    %1345 = vmatpush1.msra.mxu0 %v1298
    %1346 = vmatprep.subr.mxu0 0.0
    %1347 = vmatpush1.msra.mxu0 %v1299
    %1348 = vmatprep.subr.mxu0 0.0
    %1349 = vmatpush1.msra.mxu0 %v1300
    %1350 = vmatprep.subr.mxu0 0.0
    %1351 = vmatpush1.msra.mxu0 %v1301
    %1352 = vmatprep.subr.mxu0 0.0
    %1353 = vmatpush1.msra.mxu0 %v1302
    %1354 = vmatprep.subr.mxu0 0.0
    %1355 = vmatpush1.msra.mxu0 %v1303
    %1356 = vmatprep.subr.mxu0 0.0
    %1357 = vmatpush1.msra.mxu0 %v1304
    %1358 = vmatprep.subr.mxu0 0.0
    %1359 = vmatpush1.msra.mxu0 %v1305
    %1360 = vmatprep.subr.mxu0 0.0
    %1361 = vmatpush1.msra.mxu0 %v1306
    %1362 = vmatprep.subr.mxu0 0.0
    %1363 = vmatpush1.msra.mxu0 %v1307
    %1364 = vmatprep.subr.mxu0 0.0
    %1365 = vmatpush1.msra.mxu0 %v1308
    %1366 = vmatprep.subr.mxu0 0.0
    %1367 = vmatpush1.msra.mxu0 %v1309
    %1368 = vmatprep.subr.mxu0 0.0
    %1369 = vmatpush1.msra.mxu0 %v1310
    %1370 = vmatprep.subr.mxu0 0.0
    %1371 = vmatpush1.msra.mxu0 %v1311
    %1372 = vmatprep.subr.mxu0 0.0
    %1373 = vmatpush1.msra.mxu0 %v1312
    %1374 = vmatprep.subr.mxu0 0.0
    %1375 = vmatpush1.msra.mxu0 %v1313
    %1376 = vmatprep.subr.mxu0 0.0
    %1377 = vmatpush1.msra.mxu0 %v1314
    %1378 = vmatprep.subr.mxu0 0.0
    %1379 = vmatpush1.msra.mxu0 %v1315
    %1380 = vmatprep.subr.mxu0 0.0
    %1381 = vmatpush1.msra.mxu0 %v1316
    %1382 = vmatprep.subr.mxu0 0.0
    %1383 = vmatpush1.msra.mxu0 %v1317
    %1384 = vmatprep.subr.mxu0 0.0
    %1385 = vmatpush1.msra.mxu0 %v1318
    %1386 = vmatprep.subr.mxu0 0.0
    %1387 = vmatpush1.msra.mxu0 %v1319
    %1388 = vmatprep.subr.mxu0 0.0
    %1389 = vmatpush1.msra.mxu0 %v1320
    %1390 = vmatprep.subr.mxu0 0.0
    %1391 = vmatpush1.msra.mxu0 %v1321
    %1392 = vmatprep.subr.mxu0 0.0
    %1393 = vmatpush1.msra.mxu0 %v1322
    %1394 = vmatprep.mubr.f32.mxu0 %v1290
    %1395 = vmatmul.mubr.f32.gmra.mrb[0].mxu0 %v1289
    %v1396 = vpop.f32.mrb[0].mxu0
    %v1397 = vadd.f32 %v1328, %v1396
    %v1398 = vpop.f32.mrb[0].mxu0
    %1399 = vdwg.mxu0
    %1400 = vst [vmem:[#allocation11] sm:$0x3] %v1397
    // Predicated region
    $region66: #{tpu_custom_call.1} parent=1 // pred_check
      _
    $region67: #{tpu_custom_call.1} parent=1 // pred_check_branch
      %1402 = sbr.rel (0) target = $region69
    $region68: #{tpu_custom_call.1} parent=1 // pred_region
      %s1404 = ssub.s32 32, 32
      %1405 = vsyncadd [#allocation7], %s1404
      %s1407 = sshll.u32 [#allocation11], 4
      %s1408 = int_to_ptr.vmem [resolvable:$true] %s1407
      %1410 = dma.vmem_to_hbm [thread:$0]  %s1408, 32, %s13, [#allocation7]
    $region69: #{tpu_custom_call.1} parent=1 // pred_fallthru
      _
    // Predicated region
    $region70: #{tpu_custom_call.1} parent=1 // pred_check
      _
    $region71: #{tpu_custom_call.1} parent=1 // pred_check_branch
      %1412 = sbr.rel (0) target = $region73
    $region72: #{tpu_custom_call.1} parent=1 // pred_region
      %1413 = dma.done [#allocation7], 32
    $region73: #{tpu_custom_call.1} parent=1 // pred_fallthru
      _
    %1414 = vsyncpa [#allocation6], 1
    %1415 = vsyncpa [#allocation9], 1
    %1416 = vsyncpa [#allocation7], 1

</llo_original>
